<compile_context>
chip_gen: v6e
topology: v6e:2x2x1
jax: 0.10.0
libtpu: 0.0.40
codegen_flags: <defaults>
</compile_context>

<pallas_src>
import numpy as np
import jax
import jax.numpy as jnp
from jax import lax
from jax.experimental import pallas as pl
from jax.experimental.pallas import tpu as pltpu


# ----------------------------- config (small) -------------------------------
NUM_UTT = 8        # num_utt
BATCH = 2          # batch
NUM_WORDS = 16     # num_words (tokens per utterance)
VOCAB = 100
VOCAB_PAD = 128    # one-hot lane width (vocab padded to 128 lanes)
EMB_DIM = 32       # embedding_dim
FILTERS = 8        # cnn_filters
KERNEL_SIZES = (3, 4, 5)
K_MAX = max(KERNEL_SIZES)                 # 5
NF = len(KERNEL_SIZES) * FILTERS          # 24 (all conv filters concatenated)
CNN_OUT = 16       # cnn_output_size
AUDIO_DIM = 8
VIDEO_DIM = 8
UTT_DIM = 32       # utterance_dim
N_CLASSES = 6
CLS_PAD = 128      # lane-dense logits slab width

N_FLAT = NUM_UTT * BATCH                  # 16 flattened utterances
L_OUT_PAD = 16                            # conv time positions, padded (mult of 8)
L_PAD = L_OUT_PAD + K_MAX - 1             # 20 padded token length
NL = L_OUT_PAD * N_FLAT                   # 256 im2col rows (t-major ordering)


def _vmem():
    return pl.BlockSpec(memory_space=pltpu.MemorySpace.VMEM)


# --------------------------- the single fused kernel -------------------------
def cnn_model_kernel(tok_ref, wec_ref, negmask_ref, bconv_ref,
                     wfc_ref, bfc_ref, umask_ref, audio_ref, video_ref,
                     wf_ref, bf_ref, wc_ref, bc_ref, out_ref):
    # ---- fused embedding lookup + Conv1d(K=3,4,5):
    # one-hot each of the K_MAX window taps (lane compare vs iota), concat along
    # lanes (128-aligned blocks), one bf16 matmul against the folded
    # (embedding_table @ conv_tap) weight -> conv pre-activations.
    col = lax.broadcasted_iota(jnp.int32, (NL, VOCAB_PAD), 1)
    ohs = []
    for k in range(K_MAX):                                  # static unroll (5)
        ids = tok_ref[k]                                    # (NL, 1) int32
        ohs.append(jnp.where(ids == col, 1.0, 0.0).astype(jnp.bfloat16))
    onehot = jnp.concatenate(ohs, axis=-1)                  # (NL, K_MAX*128) bf16
    acc = jnp.dot(onehot, wec_ref[...],
                  preferred_element_type=jnp.float32)       # (NL, NF) f32

    # ---- masked max-pool over time (rows are t-major: row = t*N + n), with
    # the conv bias-add and ReLU hoisted past the pool (monotone => equal).
    nm = negmask_ref[...]                                   # (L_OUT_PAD, NF)
    pooled = acc[0:N_FLAT, :] + nm[0:1, :]
    for t in range(1, L_OUT_PAD):                           # static unroll (16)
        pooled = jnp.maximum(
            pooled, acc[t * N_FLAT:(t + 1) * N_FLAT, :] + nm[t:t + 1, :])
    pooled = jnp.maximum(pooled + bconv_ref[...], 0.0)      # (N, NF)

    # ---- fc + ReLU (dropout == identity at inference) + utterance mask.
    text_feat = jnp.maximum(
        jnp.dot(pooled.astype(jnp.bfloat16), wfc_ref[...],
                preferred_element_type=jnp.float32) + bfc_ref[...], 0.0)
    text_feat = text_feat * umask_ref[...]                  # (N, CNN_OUT)

    # ---- late fusion (stand-in Linear+ReLU over concat): single lane-concat
    # (in f32) + one bf16 matmul.
    fused_in = jnp.concatenate(
        [text_feat, audio_ref[...], video_ref[...]], axis=-1)   # (N, 32) f32
    utt = jnp.maximum(
        jnp.dot(fused_in.astype(jnp.bfloat16), wf_ref[...],
                preferred_element_type=jnp.float32) + bf_ref[...], 0.0)

    # ---- classifier + numerically-stable log_softmax over a lane-dense
    # (N, 128) logits slab; padded classes carry -1e30 bias -> exp underflows
    # to 0 and does not perturb the real 6-class log_softmax.
    logits = jnp.dot(utt.astype(jnp.bfloat16), wc_ref[...],
                     preferred_element_type=jnp.float32) + bc_ref[...]
    m = jnp.max(logits, axis=-1, keepdims=True)
    s = logits - m
    out_ref[...] = s - jnp.log(jnp.sum(jnp.exp(s), axis=-1, keepdims=True))


def fused_forward_call(tok_win, kp, umask_flat, audio_flat, video_flat):
    return pl.pallas_call(
        cnn_model_kernel,
        out_shape=jax.ShapeDtypeStruct((N_FLAT, CLS_PAD), jnp.float32),
        in_specs=[_vmem()] * 13,
        out_specs=_vmem(),
    )(tok_win, kp["wec"], kp["negmask"], kp["bconv"],
      kp["wfc"], kp["bfc"], umask_flat, audio_flat, video_flat,
      kp["wf"], kp["bf"], kp["wc_pad"], kp["bc_pad"])


# ------------------------------- parameters ---------------------------------
def init_params(key):
    """Raw parameters in the same layout convention as the reference module."""
    ks = jax.random.split(key, 12)
    emb_tab = 0.1 * jax.random.normal(ks[0], (VOCAB, EMB_DIM), jnp.float32)
    emb_tab = emb_tab.at[0].set(0.0)                     # padding_idx=0, frozen
    params = {"embedding": emb_tab}
    for i, K in enumerate(KERNEL_SIZES):
        params[f"w{K}"] = 0.1 * jax.random.normal(
            ks[1 + i], (K, EMB_DIM, FILTERS), jnp.float32)   # (K, C, F)
        params[f"b{K}"] = 0.01 * jax.random.normal(
            ks[4 + i], (1, FILTERS), jnp.float32)
    params["wfc"] = 0.1 * jax.random.normal(
        ks[7], (NF, CNN_OUT), jnp.float32)
    params["bfc"] = 0.01 * jax.random.normal(ks[8], (1, CNN_OUT), jnp.float32)
    params["wf"] = 0.1 * jax.random.normal(
        ks[9], (CNN_OUT + AUDIO_DIM + VIDEO_DIM, UTT_DIM), jnp.float32)
    params["bf"] = 0.01 * jax.random.normal(ks[10], (1, UTT_DIM), jnp.float32)
    params["wc"] = 0.1 * jax.random.normal(
        ks[11], (UTT_DIM, N_CLASSES), jnp.float32)
    params["bc"] = jnp.zeros((1, N_CLASSES), jnp.float32)
    return params


def fold_params(params):
    """One-time weight folding into kernel-ready tensors (inference-time)."""
    # Fold (one-hot @ embedding_table @ conv_tap): wec[k*128+v, :] = table[v] @ W_k
    table_pad = jnp.zeros((VOCAB_PAD, EMB_DIM), jnp.float32)
    table_pad = table_pad.at[:VOCAB].set(params["embedding"])
    blocks = []
    for k in range(K_MAX):
        taps = []
        for K in KERNEL_SIZES:
            w = params[f"w{K}"]                       # (K, C, F)
            taps.append(w[k] if k < K else jnp.zeros((EMB_DIM, FILTERS),
                                                     jnp.float32))
        w_k = jnp.concatenate(taps, axis=-1)          # (C, NF)
        blocks.append(table_pad @ w_k)                # (VOCAB_PAD, NF)
    wec = jnp.concatenate(blocks, axis=0).astype(jnp.bfloat16)  # (K_MAX*128, NF)

    # Mask excluding time positions past each kernel's valid conv range.
    neg = np.zeros((L_OUT_PAD, NF), np.float32)
    for j, K in enumerate(KERNEL_SIZES):
        valid = NUM_WORDS - K + 1
        neg[valid:, j * FILTERS:(j + 1) * FILTERS] = -1e30

    bconv = jnp.concatenate(
        [params[f"b{K}"] for K in KERNEL_SIZES], axis=-1)       # (1, NF)

    wc_pad = jnp.zeros((UTT_DIM, CLS_PAD), jnp.float32)
    wc_pad = wc_pad.at[:, :N_CLASSES].set(params["wc"]).astype(jnp.bfloat16)
    bc_pad = jnp.full((1, CLS_PAD), -1e30, jnp.float32)
    bc_pad = bc_pad.at[:, :N_CLASSES].set(params["bc"])

    return {
        "wec": wec,
        "negmask": jnp.asarray(neg),
        "bconv": bconv,
        "wfc": params["wfc"].astype(jnp.bfloat16),
        "bfc": params["bfc"],
        "wf": params["wf"].astype(jnp.bfloat16),
        "bf": params["bf"],
        "wc_pad": wc_pad,
        "bc_pad": bc_pad,
    }


# ------------------------------- forward glue --------------------------------
@jax.jit
def cnn_model_forward(kparams, text_f, seq_len, video, audio, party_mask, mask):
    # text_f: (U, B, L) int tokens; mask (umask): (B, U);
    # video: (B, U, DV); audio: (B, U, DA). seq_len / party_mask unused,
    # exactly as in the reference forward.
    del seq_len, party_mask
    U, B, L = text_f.shape
    N = U * B
    tok = text_f.reshape(N, L).astype(jnp.int32)
    # Pad the token sequence so every K_MAX-wide window is in range; padding
    # uses index 0 (zero embedding row) and padded positions are excluded from
    # the max-pool via negmask anyway.
    tok_pad = jnp.concatenate(
        [tok, jnp.zeros((N, L_PAD - L), jnp.int32)], axis=-1)        # (N, L_PAD)
    # im2col token windows, t-major rows: tok_win[k, t*N + n, 0] = tok_pad[n, t+k]
    wins = jnp.stack(
        [tok_pad[:, k:k + L_OUT_PAD] for k in range(K_MAX)], axis=0)  # (K, N, T)
    tok_win = jnp.transpose(wins, (0, 2, 1)).reshape(K_MAX, NL, 1)

    # umask -> unsqueeze(-1) -> transpose(0,1): (B,U) -> (U,B,1) -> flat (N,1)
    m = jnp.transpose(mask, (1, 0)).astype(jnp.float32).reshape(N, 1)
    # video/audio .transpose(1, 0): (B,U,D) -> (U,B,D) -> flat (N,D)
    v = jnp.transpose(video, (1, 0, 2)).astype(jnp.float32).reshape(N, VIDEO_DIM)
    a = jnp.transpose(audio, (1, 0, 2)).astype(jnp.float32).reshape(N, AUDIO_DIM)

    logp = fused_forward_call(tok_win, kparams, m, a, v)             # (N, 128)
    return logp[:, :N_CLASSES].reshape(U, B, N_CLASSES)   # log_softmax over dim 2


# ----------------------------------- main ------------------------------------
if __name__ == "__main__":
    key = jax.random.PRNGKey(0)
    k_tok, k_mask, k_vid, k_aud = jax.random.split(key, 4)

    text_f = jax.random.randint(k_tok, (NUM_UTT, BATCH, NUM_WORDS), 0, VOCAB,
                                dtype=jnp.int32)
    mask = (jax.random.uniform(k_mask, (BATCH, NUM_UTT)) > 0.2).astype(jnp.float32)
    video = jax.random.normal(k_vid, (BATCH, NUM_UTT, VIDEO_DIM), jnp.float32)
    audio = jax.random.normal(k_aud, (BATCH, NUM_UTT, AUDIO_DIM), jnp.float32)
    seq_len = jnp.full((BATCH,), NUM_WORDS, jnp.int32)
    party_mask = jnp.ones((BATCH, NUM_UTT, 2), jnp.float32)

    raw_params = init_params(jax.random.PRNGKey(1))
    kparams = fold_params(raw_params)     # one-time inference weight folding

    out = cnn_model_forward(kparams, text_f, seq_len, video, audio,
                            party_mask, mask)
    jax.block_until_ready(out)
    assert out.shape == (NUM_UTT, BATCH, N_CLASSES)
    assert bool(jnp.all(jnp.isfinite(out)))
    print("KERNEL_OK")
</pallas_src>

<mosaic_0001>
module attributes {stable_mosaic.version = 11 : i64} {
  func.func @cnn_model_kernel(%arg0: memref<5x256x1xi32, #tpu.memory_space<vmem>>, %arg1: memref<640x24xbf16, #tpu.memory_space<vmem>>, %arg2: memref<16x24xf32, #tpu.memory_space<vmem>>, %arg3: memref<1x24xf32, #tpu.memory_space<vmem>>, %arg4: memref<24x16xbf16, #tpu.memory_space<vmem>>, %arg5: memref<1x16xf32, #tpu.memory_space<vmem>>, %arg6: memref<16x1xf32, #tpu.memory_space<vmem>>, %arg7: memref<16x8xf32, #tpu.memory_space<vmem>>, %arg8: memref<16x8xf32, #tpu.memory_space<vmem>>, %arg9: memref<32x32xbf16, #tpu.memory_space<vmem>>, %arg10: memref<1x32xf32, #tpu.memory_space<vmem>>, %arg11: memref<32x128xbf16, #tpu.memory_space<vmem>>, %arg12: memref<1x128xf32, #tpu.memory_space<vmem>>, %arg13: memref<16x128xf32, #tpu.memory_space<vmem>>) attributes {dimension_semantics = [], scalar_prefetch = 0 : i64, scratch_operands = 0 : i64, tpu.core_type = #tpu.core_type<tc>} {
    %0 = tpu.iota {dimensions = array<i32: 1>} : vector<256x128xi32>
    %c0 = arith.constant 0 : index
    %c0_0 = arith.constant 0 : index
    %c0_1 = arith.constant 0 : index
    %1 = vector.load %arg0[%c0, %c0_0, %c0_1] : memref<5x256x1xi32, #tpu.memory_space<vmem>>, vector<1x256x1xi32>
    %2 = vector.shape_cast %1 : vector<1x256x1xi32> to vector<256x1xi32>
    %3 = vector.broadcast %2 : vector<256x1xi32> to vector<256x128xi32>
    %4 = arith.cmpi eq, %3, %0 : vector<256x128xi32>
    %cst = arith.constant 1.000000e+00 : f32
    %cst_2 = arith.constant 0.000000e+00 : f32
    %5 = vector.broadcast %cst : f32 to vector<256x128xf32>
    %6 = vector.broadcast %cst_2 : f32 to vector<256x128xf32>
    %7 = arith.select %4, %5, %6 : vector<256x128xi1>, vector<256x128xf32>
    %8 = arith.truncf %7 : vector<256x128xf32> to vector<256x128xbf16>
    %c1 = arith.constant 1 : index
    %c0_3 = arith.constant 0 : index
    %c0_4 = arith.constant 0 : index
    %9 = vector.load %arg0[%c1, %c0_3, %c0_4] : memref<5x256x1xi32, #tpu.memory_space<vmem>>, vector<1x256x1xi32>
    %10 = vector.shape_cast %9 : vector<1x256x1xi32> to vector<256x1xi32>
    %11 = vector.broadcast %10 : vector<256x1xi32> to vector<256x128xi32>
    %12 = arith.cmpi eq, %11, %0 : vector<256x128xi32>
    %cst_5 = arith.constant 1.000000e+00 : f32
    %cst_6 = arith.constant 0.000000e+00 : f32
    %13 = vector.broadcast %cst_5 : f32 to vector<256x128xf32>
    %14 = vector.broadcast %cst_6 : f32 to vector<256x128xf32>
    %15 = arith.select %12, %13, %14 : vector<256x128xi1>, vector<256x128xf32>
    %16 = arith.truncf %15 : vector<256x128xf32> to vector<256x128xbf16>
    %c2 = arith.constant 2 : index
    %c0_7 = arith.constant 0 : index
    %c0_8 = arith.constant 0 : index
    %17 = vector.load %arg0[%c2, %c0_7, %c0_8] : memref<5x256x1xi32, #tpu.memory_space<vmem>>, vector<1x256x1xi32>
    %18 = vector.shape_cast %17 : vector<1x256x1xi32> to vector<256x1xi32>
    %19 = vector.broadcast %18 : vector<256x1xi32> to vector<256x128xi32>
    %20 = arith.cmpi eq, %19, %0 : vector<256x128xi32>
    %cst_9 = arith.constant 1.000000e+00 : f32
    %cst_10 = arith.constant 0.000000e+00 : f32
    %21 = vector.broadcast %cst_9 : f32 to vector<256x128xf32>
    %22 = vector.broadcast %cst_10 : f32 to vector<256x128xf32>
    %23 = arith.select %20, %21, %22 : vector<256x128xi1>, vector<256x128xf32>
    %24 = arith.truncf %23 : vector<256x128xf32> to vector<256x128xbf16>
    %c3 = arith.constant 3 : index
    %c0_11 = arith.constant 0 : index
    %c0_12 = arith.constant 0 : index
    %25 = vector.load %arg0[%c3, %c0_11, %c0_12] : memref<5x256x1xi32, #tpu.memory_space<vmem>>, vector<1x256x1xi32>
    %26 = vector.shape_cast %25 : vector<1x256x1xi32> to vector<256x1xi32>
    %27 = vector.broadcast %26 : vector<256x1xi32> to vector<256x128xi32>
    %28 = arith.cmpi eq, %27, %0 : vector<256x128xi32>
    %cst_13 = arith.constant 1.000000e+00 : f32
    %cst_14 = arith.constant 0.000000e+00 : f32
    %29 = vector.broadcast %cst_13 : f32 to vector<256x128xf32>
    %30 = vector.broadcast %cst_14 : f32 to vector<256x128xf32>
    %31 = arith.select %28, %29, %30 : vector<256x128xi1>, vector<256x128xf32>
    %32 = arith.truncf %31 : vector<256x128xf32> to vector<256x128xbf16>
    %c4 = arith.constant 4 : index
    %c0_15 = arith.constant 0 : index
    %c0_16 = arith.constant 0 : index
    %33 = vector.load %arg0[%c4, %c0_15, %c0_16] : memref<5x256x1xi32, #tpu.memory_space<vmem>>, vector<1x256x1xi32>
    %34 = vector.shape_cast %33 : vector<1x256x1xi32> to vector<256x1xi32>
    %35 = vector.broadcast %34 : vector<256x1xi32> to vector<256x128xi32>
    %36 = arith.cmpi eq, %35, %0 : vector<256x128xi32>
    %cst_17 = arith.constant 1.000000e+00 : f32
    %cst_18 = arith.constant 0.000000e+00 : f32
    %37 = vector.broadcast %cst_17 : f32 to vector<256x128xf32>
    %38 = vector.broadcast %cst_18 : f32 to vector<256x128xf32>
    %39 = arith.select %36, %37, %38 : vector<256x128xi1>, vector<256x128xf32>
    %40 = arith.truncf %39 : vector<256x128xf32> to vector<256x128xbf16>
    %41 = tpu.concatenate %8, %16, %24, %32, %40 in 1 : vector<256x128xbf16>, vector<256x128xbf16>, vector<256x128xbf16>, vector<256x128xbf16>, vector<256x128xbf16> -> vector<256x640xbf16>
    %c0_19 = arith.constant 0 : index
    %c0_20 = arith.constant 0 : index
    %42 = vector.load %arg1[%c0_19, %c0_20] : memref<640x24xbf16, #tpu.memory_space<vmem>>, vector<640x24xbf16>
    %cst_21 = arith.constant dense<0.000000e+00> : vector<256x24xf32>
    %43 = tpu.matmul %41, %42, %cst_21 {dimension_numbers = #tpu.dot_dimension_numbers<[1], [0], [0], [1], [0, 0, 1, 1], [], []>} : vector<256x640xbf16>, vector<640x24xbf16>, vector<256x24xf32> -> vector<256x24xf32>
    %c0_22 = arith.constant 0 : index
    %c0_23 = arith.constant 0 : index
    %44 = vector.load %arg2[%c0_22, %c0_23] : memref<16x24xf32, #tpu.memory_space<vmem>>, vector<16x24xf32>
    %45 = vector.extract_strided_slice %43 {offsets = [0, 0], sizes = [16, 24], strides = [1, 1]} : vector<256x24xf32> to vector<16x24xf32>
    %46 = vector.extract_strided_slice %44 {offsets = [0, 0], sizes = [1, 24], strides = [1, 1]} : vector<16x24xf32> to vector<1x24xf32>
    %47 = vector.broadcast %46 : vector<1x24xf32> to vector<16x24xf32>
    %48 = arith.addf %45, %47 : vector<16x24xf32>
    %49 = vector.extract_strided_slice %43 {offsets = [16, 0], sizes = [16, 24], strides = [1, 1]} : vector<256x24xf32> to vector<16x24xf32>
    %50 = vector.extract_strided_slice %44 {offsets = [1, 0], sizes = [1, 24], strides = [1, 1]} : vector<16x24xf32> to vector<1x24xf32>
    %51 = vector.broadcast %50 : vector<1x24xf32> to vector<16x24xf32>
    %52 = arith.addf %49, %51 : vector<16x24xf32>
    %53 = arith.maximumf %48, %52 : vector<16x24xf32>
    %54 = vector.extract_strided_slice %43 {offsets = [32, 0], sizes = [16, 24], strides = [1, 1]} : vector<256x24xf32> to vector<16x24xf32>
    %55 = vector.extract_strided_slice %44 {offsets = [2, 0], sizes = [1, 24], strides = [1, 1]} : vector<16x24xf32> to vector<1x24xf32>
    %56 = vector.broadcast %55 : vector<1x24xf32> to vector<16x24xf32>
    %57 = arith.addf %54, %56 : vector<16x24xf32>
    %58 = arith.maximumf %53, %57 : vector<16x24xf32>
    %59 = vector.extract_strided_slice %43 {offsets = [48, 0], sizes = [16, 24], strides = [1, 1]} : vector<256x24xf32> to vector<16x24xf32>
    %60 = vector.extract_strided_slice %44 {offsets = [3, 0], sizes = [1, 24], strides = [1, 1]} : vector<16x24xf32> to vector<1x24xf32>
    %61 = vector.broadcast %60 : vector<1x24xf32> to vector<16x24xf32>
    %62 = arith.addf %59, %61 : vector<16x24xf32>
    %63 = arith.maximumf %58, %62 : vector<16x24xf32>
    %64 = vector.extract_strided_slice %43 {offsets = [64, 0], sizes = [16, 24], strides = [1, 1]} : vector<256x24xf32> to vector<16x24xf32>
    %65 = vector.extract_strided_slice %44 {offsets = [4, 0], sizes = [1, 24], strides = [1, 1]} : vector<16x24xf32> to vector<1x24xf32>
    %66 = vector.broadcast %65 : vector<1x24xf32> to vector<16x24xf32>
    %67 = arith.addf %64, %66 : vector<16x24xf32>
    %68 = arith.maximumf %63, %67 : vector<16x24xf32>
    %69 = vector.extract_strided_slice %43 {offsets = [80, 0], sizes = [16, 24], strides = [1, 1]} : vector<256x24xf32> to vector<16x24xf32>
    %70 = vector.extract_strided_slice %44 {offsets = [5, 0], sizes = [1, 24], strides = [1, 1]} : vector<16x24xf32> to vector<1x24xf32>
    %71 = vector.broadcast %70 : vector<1x24xf32> to vector<16x24xf32>
    %72 = arith.addf %69, %71 : vector<16x24xf32>
    %73 = arith.maximumf %68, %72 : vector<16x24xf32>
    %74 = vector.extract_strided_slice %43 {offsets = [96, 0], sizes = [16, 24], strides = [1, 1]} : vector<256x24xf32> to vector<16x24xf32>
    %75 = vector.extract_strided_slice %44 {offsets = [6, 0], sizes = [1, 24], strides = [1, 1]} : vector<16x24xf32> to vector<1x24xf32>
    %76 = vector.broadcast %75 : vector<1x24xf32> to vector<16x24xf32>
    %77 = arith.addf %74, %76 : vector<16x24xf32>
    %78 = arith.maximumf %73, %77 : vector<16x24xf32>
    %79 = vector.extract_strided_slice %43 {offsets = [112, 0], sizes = [16, 24], strides = [1, 1]} : vector<256x24xf32> to vector<16x24xf32>
    %80 = vector.extract_strided_slice %44 {offsets = [7, 0], sizes = [1, 24], strides = [1, 1]} : vector<16x24xf32> to vector<1x24xf32>
    %81 = vector.broadcast %80 : vector<1x24xf32> to vector<16x24xf32>
    %82 = arith.addf %79, %81 : vector<16x24xf32>
    %83 = arith.maximumf %78, %82 : vector<16x24xf32>
    %84 = vector.extract_strided_slice %43 {offsets = [128, 0], sizes = [16, 24], strides = [1, 1]} : vector<256x24xf32> to vector<16x24xf32>
    %85 = vector.extract_strided_slice %44 {offsets = [8, 0], sizes = [1, 24], strides = [1, 1]} : vector<16x24xf32> to vector<1x24xf32>
    %86 = vector.broadcast %85 : vector<1x24xf32> to vector<16x24xf32>
    %87 = arith.addf %84, %86 : vector<16x24xf32>
    %88 = arith.maximumf %83, %87 : vector<16x24xf32>
    %89 = vector.extract_strided_slice %43 {offsets = [144, 0], sizes = [16, 24], strides = [1, 1]} : vector<256x24xf32> to vector<16x24xf32>
    %90 = vector.extract_strided_slice %44 {offsets = [9, 0], sizes = [1, 24], strides = [1, 1]} : vector<16x24xf32> to vector<1x24xf32>
    %91 = vector.broadcast %90 : vector<1x24xf32> to vector<16x24xf32>
    %92 = arith.addf %89, %91 : vector<16x24xf32>
    %93 = arith.maximumf %88, %92 : vector<16x24xf32>
    %94 = vector.extract_strided_slice %43 {offsets = [160, 0], sizes = [16, 24], strides = [1, 1]} : vector<256x24xf32> to vector<16x24xf32>
    %95 = vector.extract_strided_slice %44 {offsets = [10, 0], sizes = [1, 24], strides = [1, 1]} : vector<16x24xf32> to vector<1x24xf32>
    %96 = vector.broadcast %95 : vector<1x24xf32> to vector<16x24xf32>
    %97 = arith.addf %94, %96 : vector<16x24xf32>
    %98 = arith.maximumf %93, %97 : vector<16x24xf32>
    %99 = vector.extract_strided_slice %43 {offsets = [176, 0], sizes = [16, 24], strides = [1, 1]} : vector<256x24xf32> to vector<16x24xf32>
    %100 = vector.extract_strided_slice %44 {offsets = [11, 0], sizes = [1, 24], strides = [1, 1]} : vector<16x24xf32> to vector<1x24xf32>
    %101 = vector.broadcast %100 : vector<1x24xf32> to vector<16x24xf32>
    %102 = arith.addf %99, %101 : vector<16x24xf32>
    %103 = arith.maximumf %98, %102 : vector<16x24xf32>
    %104 = vector.extract_strided_slice %43 {offsets = [192, 0], sizes = [16, 24], strides = [1, 1]} : vector<256x24xf32> to vector<16x24xf32>
    %105 = vector.extract_strided_slice %44 {offsets = [12, 0], sizes = [1, 24], strides = [1, 1]} : vector<16x24xf32> to vector<1x24xf32>
    %106 = vector.broadcast %105 : vector<1x24xf32> to vector<16x24xf32>
    %107 = arith.addf %104, %106 : vector<16x24xf32>
    %108 = arith.maximumf %103, %107 : vector<16x24xf32>
    %109 = vector.extract_strided_slice %43 {offsets = [208, 0], sizes = [16, 24], strides = [1, 1]} : vector<256x24xf32> to vector<16x24xf32>
    %110 = vector.extract_strided_slice %44 {offsets = [13, 0], sizes = [1, 24], strides = [1, 1]} : vector<16x24xf32> to vector<1x24xf32>
    %111 = vector.broadcast %110 : vector<1x24xf32> to vector<16x24xf32>
    %112 = arith.addf %109, %111 : vector<16x24xf32>
    %113 = arith.maximumf %108, %112 : vector<16x24xf32>
    %114 = vector.extract_strided_slice %43 {offsets = [224, 0], sizes = [16, 24], strides = [1, 1]} : vector<256x24xf32> to vector<16x24xf32>
    %115 = vector.extract_strided_slice %44 {offsets = [14, 0], sizes = [1, 24], strides = [1, 1]} : vector<16x24xf32> to vector<1x24xf32>
    %116 = vector.broadcast %115 : vector<1x24xf32> to vector<16x24xf32>
    %117 = arith.addf %114, %116 : vector<16x24xf32>
    %118 = arith.maximumf %113, %117 : vector<16x24xf32>
    %119 = vector.extract_strided_slice %43 {offsets = [240, 0], sizes = [16, 24], strides = [1, 1]} : vector<256x24xf32> to vector<16x24xf32>
    %120 = vector.extract_strided_slice %44 {offsets = [15, 0], sizes = [1, 24], strides = [1, 1]} : vector<16x24xf32> to vector<1x24xf32>
    %121 = vector.broadcast %120 : vector<1x24xf32> to vector<16x24xf32>
    %122 = arith.addf %119, %121 : vector<16x24xf32>
    %123 = arith.maximumf %118, %122 : vector<16x24xf32>
    %c0_24 = arith.constant 0 : index
    %c0_25 = arith.constant 0 : index
    %124 = vector.load %arg3[%c0_24, %c0_25] : memref<1x24xf32, #tpu.memory_space<vmem>>, vector<1x24xf32>
    %125 = vector.broadcast %124 : vector<1x24xf32> to vector<16x24xf32>
    %126 = arith.addf %123, %125 : vector<16x24xf32>
    %cst_26 = arith.constant 0.000000e+00 : f32
    %127 = vector.broadcast %cst_26 : f32 to vector<16x24xf32>
    %128 = arith.maximumf %126, %127 : vector<16x24xf32>
    %129 = arith.truncf %128 : vector<16x24xf32> to vector<16x24xbf16>
    %c0_27 = arith.constant 0 : index
    %c0_28 = arith.constant 0 : index
    %130 = vector.load %arg4[%c0_27, %c0_28] : memref<24x16xbf16, #tpu.memory_space<vmem>>, vector<24x16xbf16>
    %cst_29 = arith.constant dense<0.000000e+00> : vector<16x16xf32>
    %131 = tpu.matmul %129, %130, %cst_29 {dimension_numbers = #tpu.dot_dimension_numbers<[1], [0], [0], [1], [0, 0, 1, 1], [], []>} : vector<16x24xbf16>, vector<24x16xbf16>, vector<16x16xf32> -> vector<16x16xf32>
    %c0_30 = arith.constant 0 : index
    %c0_31 = arith.constant 0 : index
    %132 = vector.load %arg5[%c0_30, %c0_31] : memref<1x16xf32, #tpu.memory_space<vmem>>, vector<1x16xf32>
    %133 = vector.broadcast %132 : vector<1x16xf32> to vector<16x16xf32>
    %134 = arith.addf %131, %133 : vector<16x16xf32>
    %cst_32 = arith.constant 0.000000e+00 : f32
    %135 = vector.broadcast %cst_32 : f32 to vector<16x16xf32>
    %136 = arith.maximumf %134, %135 : vector<16x16xf32>
    %c0_33 = arith.constant 0 : index
    %c0_34 = arith.constant 0 : index
    %137 = vector.load %arg6[%c0_33, %c0_34] : memref<16x1xf32, #tpu.memory_space<vmem>>, vector<16x1xf32>
    %138 = vector.broadcast %137 : vector<16x1xf32> to vector<16x16xf32>
    %139 = arith.mulf %136, %138 : vector<16x16xf32>
    %c0_35 = arith.constant 0 : index
    %c0_36 = arith.constant 0 : index
    %140 = vector.load %arg7[%c0_35, %c0_36] : memref<16x8xf32, #tpu.memory_space<vmem>>, vector<16x8xf32>
    %c0_37 = arith.constant 0 : index
    %c0_38 = arith.constant 0 : index
    %141 = vector.load %arg8[%c0_37, %c0_38] : memref<16x8xf32, #tpu.memory_space<vmem>>, vector<16x8xf32>
    %142 = tpu.concatenate %139, %140, %141 in 1 : vector<16x16xf32>, vector<16x8xf32>, vector<16x8xf32> -> vector<16x32xf32>
    %143 = arith.truncf %142 : vector<16x32xf32> to vector<16x32xbf16>
    %c0_39 = arith.constant 0 : index
    %c0_40 = arith.constant 0 : index
    %144 = vector.load %arg9[%c0_39, %c0_40] : memref<32x32xbf16, #tpu.memory_space<vmem>>, vector<32x32xbf16>
    %cst_41 = arith.constant dense<0.000000e+00> : vector<16x32xf32>
    %145 = tpu.matmul %143, %144, %cst_41 {dimension_numbers = #tpu.dot_dimension_numbers<[1], [0], [0], [1], [0, 0, 1, 1], [], []>} : vector<16x32xbf16>, vector<32x32xbf16>, vector<16x32xf32> -> vector<16x32xf32>
    %c0_42 = arith.constant 0 : index
    %c0_43 = arith.constant 0 : index
    %146 = vector.load %arg10[%c0_42, %c0_43] : memref<1x32xf32, #tpu.memory_space<vmem>>, vector<1x32xf32>
    %147 = vector.broadcast %146 : vector<1x32xf32> to vector<16x32xf32>
    %148 = arith.addf %145, %147 : vector<16x32xf32>
    %cst_44 = arith.constant 0.000000e+00 : f32
    %149 = vector.broadcast %cst_44 : f32 to vector<16x32xf32>
    %150 = arith.maximumf %148, %149 : vector<16x32xf32>
    %151 = arith.truncf %150 : vector<16x32xf32> to vector<16x32xbf16>
    %c0_45 = arith.constant 0 : index
    %c0_46 = arith.constant 0 : index
    %152 = vector.load %arg11[%c0_45, %c0_46] : memref<32x128xbf16, #tpu.memory_space<vmem>>, vector<32x128xbf16>
    %cst_47 = arith.constant dense<0.000000e+00> : vector<16x128xf32>
    %153 = tpu.matmul %151, %152, %cst_47 {dimension_numbers = #tpu.dot_dimension_numbers<[1], [0], [0], [1], [0, 0, 1, 1], [], []>} : vector<16x32xbf16>, vector<32x128xbf16>, vector<16x128xf32> -> vector<16x128xf32>
    %c0_48 = arith.constant 0 : index
    %c0_49 = arith.constant 0 : index
    %154 = vector.load %arg12[%c0_48, %c0_49] : memref<1x128xf32, #tpu.memory_space<vmem>>, vector<1x128xf32>
    %155 = vector.broadcast %154 : vector<1x128xf32> to vector<16x128xf32>
    %156 = arith.addf %153, %155 : vector<16x128xf32>
    %cst_50 = arith.constant dense<0xFF800000> : vector<16xf32>
    %157 = vector.multi_reduction <maximumf>, %156, %cst_50 [1] : vector<16x128xf32> to vector<16xf32>
    %158 = vector.shape_cast %157 : vector<16xf32> to vector<16x1xf32>
    %159 = vector.broadcast %158 : vector<16x1xf32> to vector<16x128xf32>
    %160 = arith.subf %156, %159 : vector<16x128xf32>
    %161 = math.exp %160 : vector<16x128xf32>
    %cst_51 = arith.constant dense<0.000000e+00> : vector<16xf32>
    %162 = vector.multi_reduction <add>, %161, %cst_51 [1] : vector<16x128xf32> to vector<16xf32>
    %163 = vector.shape_cast %162 : vector<16xf32> to vector<16x1xf32>
    %164 = math.log %163 : vector<16x1xf32>
    %165 = vector.broadcast %164 : vector<16x1xf32> to vector<16x128xf32>
    %166 = arith.subf %160, %165 : vector<16x128xf32>
    %c0_52 = arith.constant 0 : index
    %c0_53 = arith.constant 0 : index
    %167 = vector.load %arg13[%c0_52, %c0_53] : memref<16x128xf32, #tpu.memory_space<vmem>>, vector<16x128xf32>
    tpu.vector_store %arg13[%c0_52, %c0_53], %166 {strides = array<i32>} : memref<16x128xf32, #tpu.memory_space<vmem>>, vector<16x128xf32>,
    return
  }
}

</mosaic_0001>

<llo_original>
// kernel: cnn_model_forward.1
$region0: #{cnn_model_forward.1}
  #allocation0 [shape = 'u32[]', space=smem, size = 0x4, offset = 0x4, fixed_abs, tag = 'smem constant byte address 0x4 - core index']
  #allocation1 [shape = 'u32[144,128]{1,0:T(1,128)}', space=vmem, size = 0x12000, scoped, tag = 'internal scratch']
  %s0 = inlined_call_operand.vmem [shape: s32[5,256,1], index: 0, kind: input, shape index: {}]
  %s1 = inlined_call_operand.vmem [shape: bf16[640,24], index: 1, kind: input, shape index: {}]
  %s2 = inlined_call_operand.vmem [shape: f32[16,24], index: 2, kind: input, shape index: {}]
  %s3 = inlined_call_operand.vmem [shape: f32[1,24], index: 3, kind: input, shape index: {}]
  %s4 = inlined_call_operand.vmem [shape: bf16[24,16], index: 4, kind: input, shape index: {}]
  %s5 = inlined_call_operand.vmem [shape: f32[1,16], index: 5, kind: input, shape index: {}]
  %s6 = inlined_call_operand.vmem [shape: f32[16,1], index: 6, kind: input, shape index: {}]
  %s7 = inlined_call_operand.vmem [shape: f32[16,8], index: 7, kind: input, shape index: {}]
  %s8 = inlined_call_operand.vmem [shape: f32[16,8], index: 8, kind: input, shape index: {}]
  %s9 = inlined_call_operand.vmem [shape: bf16[32,32], index: 9, kind: input, shape index: {}]
  %s10 = inlined_call_operand.vmem [shape: f32[1,32], index: 10, kind: input, shape index: {}]
  %s11 = inlined_call_operand.vmem [shape: bf16[32,128], index: 11, kind: input, shape index: {}]
  %s12 = inlined_call_operand.vmem [shape: f32[1,128], index: 12, kind: input, shape index: {}]
  %s13 = inlined_call_operand.vmem [shape: f32[16,128], index: 13, kind: output, shape index: {}]
  %s14 = sld [smem:[#allocation0]]
  $region62: #{cnn_model_forward.1} parent=0
    _
  %s16 = ssub.s32 1, %s14
  %s17 = scalar_select 0, %s16, %s14
  // Predicated region
  $region2: #{cnn_model_forward.1} parent=0 // pred_check
    _
  $region3: #{cnn_model_forward.1} parent=0 // pred_check_branch
    %19 = sbr.rel (0) target = $region5
  $region4: #{cnn_model_forward.1} parent=0 // pred_region
    _
  $region5: #{cnn_model_forward.1} parent=0 // pred_fallthru
    _
  // Predicated region
  $region6: #{cnn_model_forward.1} parent=0 // pred_check
    _
  $region7: #{cnn_model_forward.1} parent=0 // pred_check_branch
    %21 = sbr.rel (0) target = $region9
  $region8: #{cnn_model_forward.1} parent=0 // pred_region
    _
  $region9: #{cnn_model_forward.1} parent=0 // pred_fallthru
    _
  // Predicated region
  $region10: #{cnn_model_forward.1} parent=0 // pred_check
    _
  $region11: #{cnn_model_forward.1} parent=0 // pred_check_branch
    %23 = sbr.rel (0) target = $region13
  $region12: #{cnn_model_forward.1} parent=0 // pred_region
    _
  $region13: #{cnn_model_forward.1} parent=0 // pred_fallthru
    _
  // Predicated region
  $region14: #{cnn_model_forward.1} parent=0 // pred_check
    _
  $region15: #{cnn_model_forward.1} parent=0 // pred_check_branch
    %25 = sbr.rel (0) target = $region17
  $region16: #{cnn_model_forward.1} parent=0 // pred_region
    _
  $region17: #{cnn_model_forward.1} parent=0 // pred_fallthru
    _
  // Predicated region
  $region18: #{cnn_model_forward.1} parent=0 // pred_check
    _
  $region19: #{cnn_model_forward.1} parent=0 // pred_check_branch
    %27 = sbr.rel (0) target = $region21
  $region20: #{cnn_model_forward.1} parent=0 // pred_region
    _
  $region21: #{cnn_model_forward.1} parent=0 // pred_fallthru
    _
  // Predicated region
  $region22: #{cnn_model_forward.1} parent=0 // pred_check
    _
  $region23: #{cnn_model_forward.1} parent=0 // pred_check_branch
    %29 = sbr.rel (0) target = $region25
  $region24: #{cnn_model_forward.1} parent=0 // pred_region
    _
  $region25: #{cnn_model_forward.1} parent=0 // pred_fallthru
    _
  // Predicated region
  $region26: #{cnn_model_forward.1} parent=0 // pred_check
    _
  $region27: #{cnn_model_forward.1} parent=0 // pred_check_branch
    %31 = sbr.rel (0) target = $region29
  $region28: #{cnn_model_forward.1} parent=0 // pred_region
    _
  $region29: #{cnn_model_forward.1} parent=0 // pred_fallthru
    _
  // Predicated region
  $region30: #{cnn_model_forward.1} parent=0 // pred_check
    _
  $region31: #{cnn_model_forward.1} parent=0 // pred_check_branch
    %33 = sbr.rel (0) target = $region33
  $region32: #{cnn_model_forward.1} parent=0 // pred_region
    _
  $region33: #{cnn_model_forward.1} parent=0 // pred_fallthru
    _
  // Predicated region
  $region34: #{cnn_model_forward.1} parent=0 // pred_check
    _
  $region35: #{cnn_model_forward.1} parent=0 // pred_check_branch
    %35 = sbr.rel (0) target = $region37
  $region36: #{cnn_model_forward.1} parent=0 // pred_region
    _
  $region37: #{cnn_model_forward.1} parent=0 // pred_fallthru
    _
  // Predicated region
  $region38: #{cnn_model_forward.1} parent=0 // pred_check
    _
  $region39: #{cnn_model_forward.1} parent=0 // pred_check_branch
    %37 = sbr.rel (0) target = $region41
  $region40: #{cnn_model_forward.1} parent=0 // pred_region
    _
  $region41: #{cnn_model_forward.1} parent=0 // pred_fallthru
    _
  // Predicated region
  $region42: #{cnn_model_forward.1} parent=0 // pred_check
    _
  $region43: #{cnn_model_forward.1} parent=0 // pred_check_branch
    %39 = sbr.rel (0) target = $region45
  $region44: #{cnn_model_forward.1} parent=0 // pred_region
    _
  $region45: #{cnn_model_forward.1} parent=0 // pred_fallthru
    _
  // Predicated region
  $region46: #{cnn_model_forward.1} parent=0 // pred_check
    _
  $region47: #{cnn_model_forward.1} parent=0 // pred_check_branch
    %41 = sbr.rel (0) target = $region49
  $region48: #{cnn_model_forward.1} parent=0 // pred_region
    _
  $region49: #{cnn_model_forward.1} parent=0 // pred_fallthru
    _
  // Predicated region
  $region50: #{cnn_model_forward.1} parent=0 // pred_check
    _
  $region51: #{cnn_model_forward.1} parent=0 // pred_check_branch
    %43 = sbr.rel (0) target = $region53
  $region52: #{cnn_model_forward.1} parent=0 // pred_region
    _
  $region53: #{cnn_model_forward.1} parent=0 // pred_fallthru
    _
  %v45 = vlaneseq
  %v46 = vand.u32 %v45, 127
  %v47 = vld [vmem:[%s0] sm:$0xff]
  %v48 = vld [vmem:[%s0 + $0x8] sm:$0xff]
  %v49 = vld [vmem:[%s0 + $0x10] sm:$0xff]
  %v50 = vld [vmem:[%s0 + $0x18] sm:$0xff]
  %v51 = vld [vmem:[%s0 + $0x20] sm:$0xff]
  %v52 = vld [vmem:[%s0 + $0x28] sm:$0xff]
  %v53 = vld [vmem:[%s0 + $0x30] sm:$0xff]
  %v54 = vld [vmem:[%s0 + $0x38] sm:$0xff]
  %v55 = vld [vmem:[%s0 + $0x40] sm:$0xff]
  %v56 = vld [vmem:[%s0 + $0x48] sm:$0xff]
  %v57 = vld [vmem:[%s0 + $0x50] sm:$0xff]
  %v58 = vld [vmem:[%s0 + $0x58] sm:$0xff]
  %v59 = vld [vmem:[%s0 + $0x60] sm:$0xff]
  %v60 = vld [vmem:[%s0 + $0x68] sm:$0xff]
  %v61 = vld [vmem:[%s0 + $0x70] sm:$0xff]
  %v62 = vld [vmem:[%s0 + $0x78] sm:$0xff]
  %v63 = vld [vmem:[%s0 + $0x80] sm:$0xff]
  %v64 = vld [vmem:[%s0 + $0x88] sm:$0xff]
  %v65 = vld [vmem:[%s0 + $0x90] sm:$0xff]
  %v66 = vld [vmem:[%s0 + $0x98] sm:$0xff]
  %v67 = vld [vmem:[%s0 + $0xa0] sm:$0xff]
  %v68 = vld [vmem:[%s0 + $0xa8] sm:$0xff]
  %v69 = vld [vmem:[%s0 + $0xb0] sm:$0xff]
  %v70 = vld [vmem:[%s0 + $0xb8] sm:$0xff]
  %v71 = vld [vmem:[%s0 + $0xc0] sm:$0xff]
  %v72 = vld [vmem:[%s0 + $0xc8] sm:$0xff]
  %v73 = vld [vmem:[%s0 + $0xd0] sm:$0xff]
  %v74 = vld [vmem:[%s0 + $0xd8] sm:$0xff]
  %v75 = vld [vmem:[%s0 + $0xe0] sm:$0xff]
  %v76 = vld [vmem:[%s0 + $0xe8] sm:$0xff]
  %v77 = vld [vmem:[%s0 + $0xf0] sm:$0xff]
  %v78 = vld [vmem:[%s0 + $0xf8] sm:$0xff]
  %79 = vset.pattern.permute.xlu0 0
  %80 = vperm.xlu0 %79, %v47
  %v81 = vpop.permute.xlu0 %80
  %82 = vset.pattern.permute.xlu0 0
  %83 = vperm.xlu0 %82, %v48
  %v84 = vpop.permute.xlu0 %83
  %85 = vset.pattern.permute.xlu0 0
  %86 = vperm.xlu0 %85, %v49
  %v87 = vpop.permute.xlu0 %86
  %88 = vset.pattern.permute.xlu0 0
  %89 = vperm.xlu0 %88, %v50
  %v90 = vpop.permute.xlu0 %89
  %91 = vset.pattern.permute.xlu0 0
  %92 = vperm.xlu0 %91, %v51
  %v93 = vpop.permute.xlu0 %92
  %94 = vset.pattern.permute.xlu0 0
  %95 = vperm.xlu0 %94, %v52
  %v96 = vpop.permute.xlu0 %95
  %97 = vset.pattern.permute.xlu0 0
  %98 = vperm.xlu0 %97, %v53
  %v99 = vpop.permute.xlu0 %98
  %100 = vset.pattern.permute.xlu0 0
  %101 = vperm.xlu0 %100, %v54
  %v102 = vpop.permute.xlu0 %101
  %103 = vset.pattern.permute.xlu0 0
  %104 = vperm.xlu0 %103, %v55
  %v105 = vpop.permute.xlu0 %104
  %106 = vset.pattern.permute.xlu0 0
  %107 = vperm.xlu0 %106, %v56
  %v108 = vpop.permute.xlu0 %107
  %109 = vset.pattern.permute.xlu0 0
  %110 = vperm.xlu0 %109, %v57
  %v111 = vpop.permute.xlu0 %110
  %112 = vset.pattern.permute.xlu0 0
  %113 = vperm.xlu0 %112, %v58
  %v114 = vpop.permute.xlu0 %113
  %115 = vset.pattern.permute.xlu0 0
  %116 = vperm.xlu0 %115, %v59
  %v117 = vpop.permute.xlu0 %116
  %118 = vset.pattern.permute.xlu0 0
  %119 = vperm.xlu0 %118, %v60
  %v120 = vpop.permute.xlu0 %119
  %121 = vset.pattern.permute.xlu0 0
  %122 = vperm.xlu0 %121, %v61
  %v123 = vpop.permute.xlu0 %122
  %124 = vset.pattern.permute.xlu0 0
  %125 = vperm.xlu0 %124, %v62
  %v126 = vpop.permute.xlu0 %125
  %127 = vset.pattern.permute.xlu0 0
  %128 = vperm.xlu0 %127, %v63
  %v129 = vpop.permute.xlu0 %128
  %130 = vset.pattern.permute.xlu0 0
  %131 = vperm.xlu0 %130, %v64
  %v132 = vpop.permute.xlu0 %131
  %133 = vset.pattern.permute.xlu0 0
  %134 = vperm.xlu0 %133, %v65
  %v135 = vpop.permute.xlu0 %134
  %136 = vset.pattern.permute.xlu0 0
  %137 = vperm.xlu0 %136, %v66
  %v138 = vpop.permute.xlu0 %137
  %139 = vset.pattern.permute.xlu0 0
  %140 = vperm.xlu0 %139, %v67
  %v141 = vpop.permute.xlu0 %140
  %142 = vset.pattern.permute.xlu0 0
  %143 = vperm.xlu0 %142, %v68
  %v144 = vpop.permute.xlu0 %143
  %145 = vset.pattern.permute.xlu0 0
  %146 = vperm.xlu0 %145, %v69
  %v147 = vpop.permute.xlu0 %146
  %148 = vset.pattern.permute.xlu0 0
  %149 = vperm.xlu0 %148, %v70
  %v150 = vpop.permute.xlu0 %149
  %151 = vset.pattern.permute.xlu0 0
  %152 = vperm.xlu0 %151, %v71
  %v153 = vpop.permute.xlu0 %152
  %154 = vset.pattern.permute.xlu0 0
  %155 = vperm.xlu0 %154, %v72
  %v156 = vpop.permute.xlu0 %155
  %157 = vset.pattern.permute.xlu0 0
  %158 = vperm.xlu0 %157, %v73
  %v159 = vpop.permute.xlu0 %158
  %160 = vset.pattern.permute.xlu0 0
  %161 = vperm.xlu0 %160, %v74
  %v162 = vpop.permute.xlu0 %161
  %163 = vset.pattern.permute.xlu0 0
  %164 = vperm.xlu0 %163, %v75
  %v165 = vpop.permute.xlu0 %164
  %166 = vset.pattern.permute.xlu0 0
  %167 = vperm.xlu0 %166, %v76
  %v168 = vpop.permute.xlu0 %167
  %169 = vset.pattern.permute.xlu0 0
  %170 = vperm.xlu0 %169, %v77
  %v171 = vpop.permute.xlu0 %170
  %172 = vset.pattern.permute.xlu0 0
  %173 = vperm.xlu0 %172, %v78
  %v174 = vpop.permute.xlu0 %173
  %vm175 = vcmp.eq.s32.totalorder %v81, %v46
  %vm176 = vcmp.eq.s32.totalorder %v84, %v46
  %vm177 = vcmp.eq.s32.totalorder %v87, %v46
  %vm178 = vcmp.eq.s32.totalorder %v90, %v46
  %vm179 = vcmp.eq.s32.totalorder %v93, %v46
  %vm180 = vcmp.eq.s32.totalorder %v96, %v46
  %vm181 = vcmp.eq.s32.totalorder %v99, %v46
  %vm182 = vcmp.eq.s32.totalorder %v102, %v46
  %vm183 = vcmp.eq.s32.totalorder %v105, %v46
  %vm184 = vcmp.eq.s32.totalorder %v108, %v46
  %vm185 = vcmp.eq.s32.totalorder %v111, %v46
  %vm186 = vcmp.eq.s32.totalorder %v114, %v46
  %vm187 = vcmp.eq.s32.totalorder %v117, %v46
  %vm188 = vcmp.eq.s32.totalorder %v120, %v46
  %vm189 = vcmp.eq.s32.totalorder %v123, %v46
  %vm190 = vcmp.eq.s32.totalorder %v126, %v46
  %vm191 = vcmp.eq.s32.totalorder %v129, %v46
  %vm192 = vcmp.eq.s32.totalorder %v132, %v46
  %vm193 = vcmp.eq.s32.totalorder %v135, %v46
  %vm194 = vcmp.eq.s32.totalorder %v138, %v46
  %vm195 = vcmp.eq.s32.totalorder %v141, %v46
  %vm196 = vcmp.eq.s32.totalorder %v144, %v46
  %vm197 = vcmp.eq.s32.totalorder %v147, %v46
  %vm198 = vcmp.eq.s32.totalorder %v150, %v46
  %vm199 = vcmp.eq.s32.totalorder %v153, %v46
  %vm200 = vcmp.eq.s32.totalorder %v156, %v46
  %vm201 = vcmp.eq.s32.totalorder %v159, %v46
  %vm202 = vcmp.eq.s32.totalorder %v162, %v46
  %vm203 = vcmp.eq.s32.totalorder %v165, %v46
  %vm204 = vcmp.eq.s32.totalorder %v168, %v46
  %vm205 = vcmp.eq.s32.totalorder %v171, %v46
  %vm206 = vcmp.eq.s32.totalorder %v174, %v46
  %v207 = vsel %vm175, 1.0, 0.0
  %v208 = vsel %vm176, 1.0, 0.0
  %v209 = vsel %vm177, 1.0, 0.0
  %v210 = vsel %vm178, 1.0, 0.0
  %v211 = vsel %vm179, 1.0, 0.0
  %v212 = vsel %vm180, 1.0, 0.0
  %v213 = vsel %vm181, 1.0, 0.0
  %v214 = vsel %vm182, 1.0, 0.0
  %v215 = vsel %vm183, 1.0, 0.0
  %v216 = vsel %vm184, 1.0, 0.0
  %v217 = vsel %vm185, 1.0, 0.0
  %v218 = vsel %vm186, 1.0, 0.0
  %v219 = vsel %vm187, 1.0, 0.0
  %v220 = vsel %vm188, 1.0, 0.0
  %v221 = vsel %vm189, 1.0, 0.0
  %v222 = vsel %vm190, 1.0, 0.0
  %v223 = vsel %vm191, 1.0, 0.0
  %v224 = vsel %vm192, 1.0, 0.0
  %v225 = vsel %vm193, 1.0, 0.0
  %v226 = vsel %vm194, 1.0, 0.0
  %v227 = vsel %vm195, 1.0, 0.0
  %v228 = vsel %vm196, 1.0, 0.0
  %v229 = vsel %vm197, 1.0, 0.0
  %v230 = vsel %vm198, 1.0, 0.0
  %v231 = vsel %vm199, 1.0, 0.0
  %v232 = vsel %vm200, 1.0, 0.0
  %v233 = vsel %vm201, 1.0, 0.0
  %v234 = vsel %vm202, 1.0, 0.0
  %v235 = vsel %vm203, 1.0, 0.0
  %v236 = vsel %vm204, 1.0, 0.0
  %v237 = vsel %vm205, 1.0, 0.0
  %v238 = vsel %vm206, 1.0, 0.0
  %v239 = vpack.c.bf16 %v208, %v207
  %v240 = vpack.c.bf16 %v210, %v209
  %v241 = vpack.c.bf16 %v212, %v211
  %v242 = vpack.c.bf16 %v214, %v213
  %v243 = vpack.c.bf16 %v216, %v215
  %v244 = vpack.c.bf16 %v218, %v217
  %v245 = vpack.c.bf16 %v220, %v219
  %v246 = vpack.c.bf16 %v222, %v221
  %v247 = vpack.c.bf16 %v224, %v223
  %v248 = vpack.c.bf16 %v226, %v225
  %v249 = vpack.c.bf16 %v228, %v227
  %v250 = vpack.c.bf16 %v230, %v229
  %v251 = vpack.c.bf16 %v232, %v231
  %v252 = vpack.c.bf16 %v234, %v233
  %v253 = vpack.c.bf16 %v236, %v235
  %v254 = vpack.c.bf16 %v238, %v237
  %s255 = scalar_lea.vmem %s0, 256
  %v256 = vld [vmem:[%s255] sm:$0xff]
  %v257 = vld [vmem:[%s255 + $0x8] sm:$0xff]
  %v258 = vld [vmem:[%s255 + $0x10] sm:$0xff]
  %v259 = vld [vmem:[%s255 + $0x18] sm:$0xff]
  %v260 = vld [vmem:[%s255 + $0x20] sm:$0xff]
  %v261 = vld [vmem:[%s255 + $0x28] sm:$0xff]
  %v262 = vld [vmem:[%s255 + $0x30] sm:$0xff]
  %v263 = vld [vmem:[%s255 + $0x38] sm:$0xff]
  %v264 = vld [vmem:[%s255 + $0x40] sm:$0xff]
  %v265 = vld [vmem:[%s255 + $0x48] sm:$0xff]
  %v266 = vld [vmem:[%s255 + $0x50] sm:$0xff]
  %v267 = vld [vmem:[%s255 + $0x58] sm:$0xff]
  %v268 = vld [vmem:[%s255 + $0x60] sm:$0xff]
  %v269 = vld [vmem:[%s255 + $0x68] sm:$0xff]
  %v270 = vld [vmem:[%s255 + $0x70] sm:$0xff]
  %v271 = vld [vmem:[%s255 + $0x78] sm:$0xff]
  %v272 = vld [vmem:[%s255 + $0x80] sm:$0xff]
  %v273 = vld [vmem:[%s255 + $0x88] sm:$0xff]
  %v274 = vld [vmem:[%s255 + $0x90] sm:$0xff]
  %v275 = vld [vmem:[%s255 + $0x98] sm:$0xff]
  %v276 = vld [vmem:[%s255 + $0xa0] sm:$0xff]
  %v277 = vld [vmem:[%s255 + $0xa8] sm:$0xff]
  %v278 = vld [vmem:[%s255 + $0xb0] sm:$0xff]
  %v279 = vld [vmem:[%s255 + $0xb8] sm:$0xff]
  %v280 = vld [vmem:[%s255 + $0xc0] sm:$0xff]
  %v281 = vld [vmem:[%s255 + $0xc8] sm:$0xff]
  %v282 = vld [vmem:[%s255 + $0xd0] sm:$0xff]
  %v283 = vld [vmem:[%s255 + $0xd8] sm:$0xff]
  %v284 = vld [vmem:[%s255 + $0xe0] sm:$0xff]
  %v285 = vld [vmem:[%s255 + $0xe8] sm:$0xff]
  %v286 = vld [vmem:[%s255 + $0xf0] sm:$0xff]
  %v287 = vld [vmem:[%s255 + $0xf8] sm:$0xff]
  %288 = vset.pattern.permute.xlu0 0
  %289 = vperm.xlu0 %288, %v256
  %v290 = vpop.permute.xlu0 %289
  %291 = vset.pattern.permute.xlu0 0
  %292 = vperm.xlu0 %291, %v257
  %v293 = vpop.permute.xlu0 %292
  %294 = vset.pattern.permute.xlu0 0
  %295 = vperm.xlu0 %294, %v258
  %v296 = vpop.permute.xlu0 %295
  %297 = vset.pattern.permute.xlu0 0
  %298 = vperm.xlu0 %297, %v259
  %v299 = vpop.permute.xlu0 %298
  %300 = vset.pattern.permute.xlu0 0
  %301 = vperm.xlu0 %300, %v260
  %v302 = vpop.permute.xlu0 %301
  %303 = vset.pattern.permute.xlu0 0
  %304 = vperm.xlu0 %303, %v261
  %v305 = vpop.permute.xlu0 %304
  %306 = vset.pattern.permute.xlu0 0
  %307 = vperm.xlu0 %306, %v262
  %v308 = vpop.permute.xlu0 %307
  %309 = vset.pattern.permute.xlu0 0
  %310 = vperm.xlu0 %309, %v263
  %v311 = vpop.permute.xlu0 %310
  %312 = vset.pattern.permute.xlu0 0
  %313 = vperm.xlu0 %312, %v264
  %v314 = vpop.permute.xlu0 %313
  %315 = vset.pattern.permute.xlu0 0
  %316 = vperm.xlu0 %315, %v265
  %v317 = vpop.permute.xlu0 %316
  %318 = vset.pattern.permute.xlu0 0
  %319 = vperm.xlu0 %318, %v266
  %v320 = vpop.permute.xlu0 %319
  %321 = vset.pattern.permute.xlu0 0
  %322 = vperm.xlu0 %321, %v267
  %v323 = vpop.permute.xlu0 %322
  %324 = vset.pattern.permute.xlu0 0
  %325 = vperm.xlu0 %324, %v268
  %v326 = vpop.permute.xlu0 %325
  %327 = vset.pattern.permute.xlu0 0
  %328 = vperm.xlu0 %327, %v269
  %v329 = vpop.permute.xlu0 %328
  %330 = vset.pattern.permute.xlu0 0
  %331 = vperm.xlu0 %330, %v270
  %v332 = vpop.permute.xlu0 %331
  %333 = vset.pattern.permute.xlu0 0
  %334 = vperm.xlu0 %333, %v271
  %v335 = vpop.permute.xlu0 %334
  %336 = vset.pattern.permute.xlu0 0
  %337 = vperm.xlu0 %336, %v272
  %v338 = vpop.permute.xlu0 %337
  %339 = vset.pattern.permute.xlu0 0
  %340 = vperm.xlu0 %339, %v273
  %v341 = vpop.permute.xlu0 %340
  %342 = vset.pattern.permute.xlu0 0
  %343 = vperm.xlu0 %342, %v274
  %v344 = vpop.permute.xlu0 %343
  %345 = vset.pattern.permute.xlu0 0
  %346 = vperm.xlu0 %345, %v275
  %v347 = vpop.permute.xlu0 %346
  %348 = vset.pattern.permute.xlu0 0
  %349 = vperm.xlu0 %348, %v276
  %v350 = vpop.permute.xlu0 %349
  %351 = vset.pattern.permute.xlu0 0
  %352 = vperm.xlu0 %351, %v277
  %v353 = vpop.permute.xlu0 %352
  %354 = vset.pattern.permute.xlu0 0
  %355 = vperm.xlu0 %354, %v278
  %v356 = vpop.permute.xlu0 %355
  %357 = vset.pattern.permute.xlu0 0
  %358 = vperm.xlu0 %357, %v279
  %v359 = vpop.permute.xlu0 %358
  %360 = vset.pattern.permute.xlu0 0
  %361 = vperm.xlu0 %360, %v280
  %v362 = vpop.permute.xlu0 %361
  %363 = vset.pattern.permute.xlu0 0
  %364 = vperm.xlu0 %363, %v281
  %v365 = vpop.permute.xlu0 %364
  %366 = vset.pattern.permute.xlu0 0
  %367 = vperm.xlu0 %366, %v282
  %v368 = vpop.permute.xlu0 %367
  %369 = vset.pattern.permute.xlu0 0
  %370 = vperm.xlu0 %369, %v283
  %v371 = vpop.permute.xlu0 %370
  %372 = vset.pattern.permute.xlu0 0
  %373 = vperm.xlu0 %372, %v284
  %v374 = vpop.permute.xlu0 %373
  %375 = vset.pattern.permute.xlu0 0
  %376 = vperm.xlu0 %375, %v285
  %v377 = vpop.permute.xlu0 %376
  %378 = vset.pattern.permute.xlu0 0
  %379 = vperm.xlu0 %378, %v286
  %v380 = vpop.permute.xlu0 %379
  %381 = vset.pattern.permute.xlu0 0
  %382 = vperm.xlu0 %381, %v287
  %v383 = vpop.permute.xlu0 %382
  %vm384 = vcmp.eq.s32.totalorder %v290, %v46
  %vm385 = vcmp.eq.s32.totalorder %v293, %v46
  %vm386 = vcmp.eq.s32.totalorder %v296, %v46
  %vm387 = vcmp.eq.s32.totalorder %v299, %v46
  %vm388 = vcmp.eq.s32.totalorder %v302, %v46
  %vm389 = vcmp.eq.s32.totalorder %v305, %v46
  %vm390 = vcmp.eq.s32.totalorder %v308, %v46
  %vm391 = vcmp.eq.s32.totalorder %v311, %v46
  %vm392 = vcmp.eq.s32.totalorder %v314, %v46
  %vm393 = vcmp.eq.s32.totalorder %v317, %v46
  %vm394 = vcmp.eq.s32.totalorder %v320, %v46
  %vm395 = vcmp.eq.s32.totalorder %v323, %v46
  %vm396 = vcmp.eq.s32.totalorder %v326, %v46
  %vm397 = vcmp.eq.s32.totalorder %v329, %v46
  %vm398 = vcmp.eq.s32.totalorder %v332, %v46
  %vm399 = vcmp.eq.s32.totalorder %v335, %v46
  %vm400 = vcmp.eq.s32.totalorder %v338, %v46
  %vm401 = vcmp.eq.s32.totalorder %v341, %v46
  %vm402 = vcmp.eq.s32.totalorder %v344, %v46
  %vm403 = vcmp.eq.s32.totalorder %v347, %v46
  %vm404 = vcmp.eq.s32.totalorder %v350, %v46
  %vm405 = vcmp.eq.s32.totalorder %v353, %v46
  %vm406 = vcmp.eq.s32.totalorder %v356, %v46
  %vm407 = vcmp.eq.s32.totalorder %v359, %v46
  %vm408 = vcmp.eq.s32.totalorder %v362, %v46
  %vm409 = vcmp.eq.s32.totalorder %v365, %v46
  %vm410 = vcmp.eq.s32.totalorder %v368, %v46
  %vm411 = vcmp.eq.s32.totalorder %v371, %v46
  %vm412 = vcmp.eq.s32.totalorder %v374, %v46
  %vm413 = vcmp.eq.s32.totalorder %v377, %v46
  %vm414 = vcmp.eq.s32.totalorder %v380, %v46
  %vm415 = vcmp.eq.s32.totalorder %v383, %v46
  %v416 = vsel %vm384, 1.0, 0.0
  %v417 = vsel %vm385, 1.0, 0.0
  %v418 = vsel %vm386, 1.0, 0.0
  %v419 = vsel %vm387, 1.0, 0.0
  %v420 = vsel %vm388, 1.0, 0.0
  %v421 = vsel %vm389, 1.0, 0.0
  %v422 = vsel %vm390, 1.0, 0.0
  %v423 = vsel %vm391, 1.0, 0.0
  %v424 = vsel %vm392, 1.0, 0.0
  %v425 = vsel %vm393, 1.0, 0.0
  %v426 = vsel %vm394, 1.0, 0.0
  %v427 = vsel %vm395, 1.0, 0.0
  %v428 = vsel %vm396, 1.0, 0.0
  %v429 = vsel %vm397, 1.0, 0.0
  %v430 = vsel %vm398, 1.0, 0.0
  %v431 = vsel %vm399, 1.0, 0.0
  %v432 = vsel %vm400, 1.0, 0.0
  %v433 = vsel %vm401, 1.0, 0.0
  %v434 = vsel %vm402, 1.0, 0.0
  %v435 = vsel %vm403, 1.0, 0.0
  %v436 = vsel %vm404, 1.0, 0.0
  %v437 = vsel %vm405, 1.0, 0.0
  %v438 = vsel %vm406, 1.0, 0.0
  %v439 = vsel %vm407, 1.0, 0.0
  %v440 = vsel %vm408, 1.0, 0.0
  %v441 = vsel %vm409, 1.0, 0.0
  %v442 = vsel %vm410, 1.0, 0.0
  %v443 = vsel %vm411, 1.0, 0.0
  %v444 = vsel %vm412, 1.0, 0.0
  %v445 = vsel %vm413, 1.0, 0.0
  %v446 = vsel %vm414, 1.0, 0.0
  %v447 = vsel %vm415, 1.0, 0.0
  %v448 = vpack.c.bf16 %v417, %v416
  %v449 = vpack.c.bf16 %v419, %v418
  %v450 = vpack.c.bf16 %v421, %v420
  %v451 = vpack.c.bf16 %v423, %v422
  %v452 = vpack.c.bf16 %v425, %v424
  %v453 = vpack.c.bf16 %v427, %v426
  %v454 = vpack.c.bf16 %v429, %v428
  %v455 = vpack.c.bf16 %v431, %v430
  %v456 = vpack.c.bf16 %v433, %v432
  %v457 = vpack.c.bf16 %v435, %v434
  %v458 = vpack.c.bf16 %v437, %v436
  %v459 = vpack.c.bf16 %v439, %v438
  %v460 = vpack.c.bf16 %v441, %v440
  %v461 = vpack.c.bf16 %v443, %v442
  %v462 = vpack.c.bf16 %v445, %v444
  %v463 = vpack.c.bf16 %v447, %v446
  %s464 = scalar_lea.vmem %s0, 512
  %v465 = vld [vmem:[%s464] sm:$0xff]
  %v466 = vld [vmem:[%s464 + $0x8] sm:$0xff]
  %v467 = vld [vmem:[%s464 + $0x10] sm:$0xff]
  %v468 = vld [vmem:[%s464 + $0x18] sm:$0xff]
  %v469 = vld [vmem:[%s464 + $0x20] sm:$0xff]
  %v470 = vld [vmem:[%s464 + $0x28] sm:$0xff]
  %v471 = vld [vmem:[%s464 + $0x30] sm:$0xff]
  %v472 = vld [vmem:[%s464 + $0x38] sm:$0xff]
  %v473 = vld [vmem:[%s464 + $0x40] sm:$0xff]
  %v474 = vld [vmem:[%s464 + $0x48] sm:$0xff]
  %v475 = vld [vmem:[%s464 + $0x50] sm:$0xff]
  %v476 = vld [vmem:[%s464 + $0x58] sm:$0xff]
  %v477 = vld [vmem:[%s464 + $0x60] sm:$0xff]
  %v478 = vld [vmem:[%s464 + $0x68] sm:$0xff]
  %v479 = vld [vmem:[%s464 + $0x70] sm:$0xff]
  %v480 = vld [vmem:[%s464 + $0x78] sm:$0xff]
  %v481 = vld [vmem:[%s464 + $0x80] sm:$0xff]
  %v482 = vld [vmem:[%s464 + $0x88] sm:$0xff]
  %v483 = vld [vmem:[%s464 + $0x90] sm:$0xff]
  %v484 = vld [vmem:[%s464 + $0x98] sm:$0xff]
  %v485 = vld [vmem:[%s464 + $0xa0] sm:$0xff]
  %v486 = vld [vmem:[%s464 + $0xa8] sm:$0xff]
  %v487 = vld [vmem:[%s464 + $0xb0] sm:$0xff]
  %v488 = vld [vmem:[%s464 + $0xb8] sm:$0xff]
  %v489 = vld [vmem:[%s464 + $0xc0] sm:$0xff]
  %v490 = vld [vmem:[%s464 + $0xc8] sm:$0xff]
  %v491 = vld [vmem:[%s464 + $0xd0] sm:$0xff]
  %v492 = vld [vmem:[%s464 + $0xd8] sm:$0xff]
  %v493 = vld [vmem:[%s464 + $0xe0] sm:$0xff]
  %v494 = vld [vmem:[%s464 + $0xe8] sm:$0xff]
  %v495 = vld [vmem:[%s464 + $0xf0] sm:$0xff]
  %v496 = vld [vmem:[%s464 + $0xf8] sm:$0xff]
  %497 = vset.pattern.permute.xlu0 0
  %498 = vperm.xlu0 %497, %v465
  %v499 = vpop.permute.xlu0 %498
  %500 = vset.pattern.permute.xlu0 0
  %501 = vperm.xlu0 %500, %v466
  %v502 = vpop.permute.xlu0 %501
  %503 = vset.pattern.permute.xlu0 0
  %504 = vperm.xlu0 %503, %v467
  %v505 = vpop.permute.xlu0 %504
  %506 = vset.pattern.permute.xlu0 0
  %507 = vperm.xlu0 %506, %v468
  %v508 = vpop.permute.xlu0 %507
  %509 = vset.pattern.permute.xlu0 0
  %510 = vperm.xlu0 %509, %v469
  %v511 = vpop.permute.xlu0 %510
  %512 = vset.pattern.permute.xlu0 0
  %513 = vperm.xlu0 %512, %v470
  %v514 = vpop.permute.xlu0 %513
  %515 = vset.pattern.permute.xlu0 0
  %516 = vperm.xlu0 %515, %v471
  %v517 = vpop.permute.xlu0 %516
  %518 = vset.pattern.permute.xlu0 0
  %519 = vperm.xlu0 %518, %v472
  %v520 = vpop.permute.xlu0 %519
  %521 = vset.pattern.permute.xlu0 0
  %522 = vperm.xlu0 %521, %v473
  %v523 = vpop.permute.xlu0 %522
  %524 = vset.pattern.permute.xlu0 0
  %525 = vperm.xlu0 %524, %v474
  %v526 = vpop.permute.xlu0 %525
  %527 = vset.pattern.permute.xlu0 0
  %528 = vperm.xlu0 %527, %v475
  %v529 = vpop.permute.xlu0 %528
  %530 = vset.pattern.permute.xlu0 0
  %531 = vperm.xlu0 %530, %v476
  %v532 = vpop.permute.xlu0 %531
  %533 = vset.pattern.permute.xlu0 0
  %534 = vperm.xlu0 %533, %v477
  %v535 = vpop.permute.xlu0 %534
  %536 = vset.pattern.permute.xlu0 0
  %537 = vperm.xlu0 %536, %v478
  %v538 = vpop.permute.xlu0 %537
  %539 = vset.pattern.permute.xlu0 0
  %540 = vperm.xlu0 %539, %v479
  %v541 = vpop.permute.xlu0 %540
  %542 = vset.pattern.permute.xlu0 0
  %543 = vperm.xlu0 %542, %v480
  %v544 = vpop.permute.xlu0 %543
  %545 = vset.pattern.permute.xlu0 0
  %546 = vperm.xlu0 %545, %v481
  %v547 = vpop.permute.xlu0 %546
  %548 = vset.pattern.permute.xlu0 0
  %549 = vperm.xlu0 %548, %v482
  %v550 = vpop.permute.xlu0 %549
  %551 = vset.pattern.permute.xlu0 0
  %552 = vperm.xlu0 %551, %v483
  %v553 = vpop.permute.xlu0 %552
  %554 = vset.pattern.permute.xlu0 0
  %555 = vperm.xlu0 %554, %v484
  %v556 = vpop.permute.xlu0 %555
  %557 = vset.pattern.permute.xlu0 0
  %558 = vperm.xlu0 %557, %v485
  %v559 = vpop.permute.xlu0 %558
  %560 = vset.pattern.permute.xlu0 0
  %561 = vperm.xlu0 %560, %v486
  %v562 = vpop.permute.xlu0 %561
  %563 = vset.pattern.permute.xlu0 0
  %564 = vperm.xlu0 %563, %v487
  %v565 = vpop.permute.xlu0 %564
  %566 = vset.pattern.permute.xlu0 0
  %567 = vperm.xlu0 %566, %v488
  %v568 = vpop.permute.xlu0 %567
  %569 = vset.pattern.permute.xlu0 0
  %570 = vperm.xlu0 %569, %v489
  %v571 = vpop.permute.xlu0 %570
  %572 = vset.pattern.permute.xlu0 0
  %573 = vperm.xlu0 %572, %v490
  %v574 = vpop.permute.xlu0 %573
  %575 = vset.pattern.permute.xlu0 0
  %576 = vperm.xlu0 %575, %v491
  %v577 = vpop.permute.xlu0 %576
  %578 = vset.pattern.permute.xlu0 0
  %579 = vperm.xlu0 %578, %v492
  %v580 = vpop.permute.xlu0 %579
  %581 = vset.pattern.permute.xlu0 0
  %582 = vperm.xlu0 %581, %v493
  %v583 = vpop.permute.xlu0 %582
  %584 = vset.pattern.permute.xlu0 0
  %585 = vperm.xlu0 %584, %v494
  %v586 = vpop.permute.xlu0 %585
  %587 = vset.pattern.permute.xlu0 0
  %588 = vperm.xlu0 %587, %v495
  %v589 = vpop.permute.xlu0 %588
  %590 = vset.pattern.permute.xlu0 0
  %591 = vperm.xlu0 %590, %v496
  %v592 = vpop.permute.xlu0 %591
  %vm593 = vcmp.eq.s32.totalorder %v499, %v46
  %vm594 = vcmp.eq.s32.totalorder %v502, %v46
  %vm595 = vcmp.eq.s32.totalorder %v505, %v46
  %vm596 = vcmp.eq.s32.totalorder %v508, %v46
  %vm597 = vcmp.eq.s32.totalorder %v511, %v46
  %vm598 = vcmp.eq.s32.totalorder %v514, %v46
  %vm599 = vcmp.eq.s32.totalorder %v517, %v46
  %vm600 = vcmp.eq.s32.totalorder %v520, %v46
  %vm601 = vcmp.eq.s32.totalorder %v523, %v46
  %vm602 = vcmp.eq.s32.totalorder %v526, %v46
  %vm603 = vcmp.eq.s32.totalorder %v529, %v46
  %vm604 = vcmp.eq.s32.totalorder %v532, %v46
  %vm605 = vcmp.eq.s32.totalorder %v535, %v46
  %vm606 = vcmp.eq.s32.totalorder %v538, %v46
  %vm607 = vcmp.eq.s32.totalorder %v541, %v46
  %vm608 = vcmp.eq.s32.totalorder %v544, %v46
  %vm609 = vcmp.eq.s32.totalorder %v547, %v46
  %vm610 = vcmp.eq.s32.totalorder %v550, %v46
  %vm611 = vcmp.eq.s32.totalorder %v553, %v46
  %vm612 = vcmp.eq.s32.totalorder %v556, %v46
  %vm613 = vcmp.eq.s32.totalorder %v559, %v46
  %vm614 = vcmp.eq.s32.totalorder %v562, %v46
  %vm615 = vcmp.eq.s32.totalorder %v565, %v46
  %vm616 = vcmp.eq.s32.totalorder %v568, %v46
  %vm617 = vcmp.eq.s32.totalorder %v571, %v46
  %vm618 = vcmp.eq.s32.totalorder %v574, %v46
  %vm619 = vcmp.eq.s32.totalorder %v577, %v46
  %vm620 = vcmp.eq.s32.totalorder %v580, %v46
  %vm621 = vcmp.eq.s32.totalorder %v583, %v46
  %vm622 = vcmp.eq.s32.totalorder %v586, %v46
  %vm623 = vcmp.eq.s32.totalorder %v589, %v46
  %vm624 = vcmp.eq.s32.totalorder %v592, %v46
  %v625 = vsel %vm593, 1.0, 0.0
  %v626 = vsel %vm594, 1.0, 0.0
  %v627 = vsel %vm595, 1.0, 0.0
  %v628 = vsel %vm596, 1.0, 0.0
  %v629 = vsel %vm597, 1.0, 0.0
  %v630 = vsel %vm598, 1.0, 0.0
  %v631 = vsel %vm599, 1.0, 0.0
  %v632 = vsel %vm600, 1.0, 0.0
  %v633 = vsel %vm601, 1.0, 0.0
  %v634 = vsel %vm602, 1.0, 0.0
  %v635 = vsel %vm603, 1.0, 0.0
  %v636 = vsel %vm604, 1.0, 0.0
  %v637 = vsel %vm605, 1.0, 0.0
  %v638 = vsel %vm606, 1.0, 0.0
  %v639 = vsel %vm607, 1.0, 0.0
  %v640 = vsel %vm608, 1.0, 0.0
  %v641 = vsel %vm609, 1.0, 0.0
  %v642 = vsel %vm610, 1.0, 0.0
  %v643 = vsel %vm611, 1.0, 0.0
  %v644 = vsel %vm612, 1.0, 0.0
  %v645 = vsel %vm613, 1.0, 0.0
  %v646 = vsel %vm614, 1.0, 0.0
  %v647 = vsel %vm615, 1.0, 0.0
  %v648 = vsel %vm616, 1.0, 0.0
  %v649 = vsel %vm617, 1.0, 0.0
  %v650 = vsel %vm618, 1.0, 0.0
  %v651 = vsel %vm619, 1.0, 0.0
  %v652 = vsel %vm620, 1.0, 0.0
  %v653 = vsel %vm621, 1.0, 0.0
  %v654 = vsel %vm622, 1.0, 0.0
  %v655 = vsel %vm623, 1.0, 0.0
  %v656 = vsel %vm624, 1.0, 0.0
  %v657 = vpack.c.bf16 %v626, %v625
  %v658 = vpack.c.bf16 %v628, %v627
  %v659 = vpack.c.bf16 %v630, %v629
  %v660 = vpack.c.bf16 %v632, %v631
  %v661 = vpack.c.bf16 %v634, %v633
  %v662 = vpack.c.bf16 %v636, %v635
  %v663 = vpack.c.bf16 %v638, %v637
  %v664 = vpack.c.bf16 %v640, %v639
  %v665 = vpack.c.bf16 %v642, %v641
  %v666 = vpack.c.bf16 %v644, %v643
  %v667 = vpack.c.bf16 %v646, %v645
  %v668 = vpack.c.bf16 %v648, %v647
  %v669 = vpack.c.bf16 %v650, %v649
  %v670 = vpack.c.bf16 %v652, %v651
  %v671 = vpack.c.bf16 %v654, %v653
  %v672 = vpack.c.bf16 %v656, %v655
  %s673 = scalar_lea.vmem %s0, 768
  %v674 = vld [vmem:[%s673] sm:$0xff]
  %v675 = vld [vmem:[%s673 + $0x8] sm:$0xff]
  %v676 = vld [vmem:[%s673 + $0x10] sm:$0xff]
  %v677 = vld [vmem:[%s673 + $0x18] sm:$0xff]
  %v678 = vld [vmem:[%s673 + $0x20] sm:$0xff]
  %v679 = vld [vmem:[%s673 + $0x28] sm:$0xff]
  %v680 = vld [vmem:[%s673 + $0x30] sm:$0xff]
  %v681 = vld [vmem:[%s673 + $0x38] sm:$0xff]
  %v682 = vld [vmem:[%s673 + $0x40] sm:$0xff]
  %v683 = vld [vmem:[%s673 + $0x48] sm:$0xff]
  %v684 = vld [vmem:[%s673 + $0x50] sm:$0xff]
  %v685 = vld [vmem:[%s673 + $0x58] sm:$0xff]
  %v686 = vld [vmem:[%s673 + $0x60] sm:$0xff]
  %v687 = vld [vmem:[%s673 + $0x68] sm:$0xff]
  %v688 = vld [vmem:[%s673 + $0x70] sm:$0xff]
  %v689 = vld [vmem:[%s673 + $0x78] sm:$0xff]
  %v690 = vld [vmem:[%s673 + $0x80] sm:$0xff]
  %v691 = vld [vmem:[%s673 + $0x88] sm:$0xff]
  %v692 = vld [vmem:[%s673 + $0x90] sm:$0xff]
  %v693 = vld [vmem:[%s673 + $0x98] sm:$0xff]
  %v694 = vld [vmem:[%s673 + $0xa0] sm:$0xff]
  %v695 = vld [vmem:[%s673 + $0xa8] sm:$0xff]
  %v696 = vld [vmem:[%s673 + $0xb0] sm:$0xff]
  %v697 = vld [vmem:[%s673 + $0xb8] sm:$0xff]
  %v698 = vld [vmem:[%s673 + $0xc0] sm:$0xff]
  %v699 = vld [vmem:[%s673 + $0xc8] sm:$0xff]
  %v700 = vld [vmem:[%s673 + $0xd0] sm:$0xff]
  %v701 = vld [vmem:[%s673 + $0xd8] sm:$0xff]
  %v702 = vld [vmem:[%s673 + $0xe0] sm:$0xff]
  %v703 = vld [vmem:[%s673 + $0xe8] sm:$0xff]
  %v704 = vld [vmem:[%s673 + $0xf0] sm:$0xff]
  %v705 = vld [vmem:[%s673 + $0xf8] sm:$0xff]
  %706 = vset.pattern.permute.xlu0 0
  %707 = vperm.xlu0 %706, %v674
  %v708 = vpop.permute.xlu0 %707
  %709 = vset.pattern.permute.xlu0 0
  %710 = vperm.xlu0 %709, %v675
  %v711 = vpop.permute.xlu0 %710
  %712 = vset.pattern.permute.xlu0 0
  %713 = vperm.xlu0 %712, %v676
  %v714 = vpop.permute.xlu0 %713
  %715 = vset.pattern.permute.xlu0 0
  %716 = vperm.xlu0 %715, %v677
  %v717 = vpop.permute.xlu0 %716
  %718 = vset.pattern.permute.xlu0 0
  %719 = vperm.xlu0 %718, %v678
  %v720 = vpop.permute.xlu0 %719
  %721 = vset.pattern.permute.xlu0 0
  %722 = vperm.xlu0 %721, %v679
  %v723 = vpop.permute.xlu0 %722
  %724 = vset.pattern.permute.xlu0 0
  %725 = vperm.xlu0 %724, %v680
  %v726 = vpop.permute.xlu0 %725
  %727 = vset.pattern.permute.xlu0 0
  %728 = vperm.xlu0 %727, %v681
  %v729 = vpop.permute.xlu0 %728
  %730 = vset.pattern.permute.xlu0 0
  %731 = vperm.xlu0 %730, %v682
  %v732 = vpop.permute.xlu0 %731
  %733 = vset.pattern.permute.xlu0 0
  %734 = vperm.xlu0 %733, %v683
  %v735 = vpop.permute.xlu0 %734
  %736 = vset.pattern.permute.xlu0 0
  %737 = vperm.xlu0 %736, %v684
  %v738 = vpop.permute.xlu0 %737
  %739 = vset.pattern.permute.xlu0 0
  %740 = vperm.xlu0 %739, %v685
  %v741 = vpop.permute.xlu0 %740
  %742 = vset.pattern.permute.xlu0 0
  %743 = vperm.xlu0 %742, %v686
  %v744 = vpop.permute.xlu0 %743
  %745 = vset.pattern.permute.xlu0 0
  %746 = vperm.xlu0 %745, %v687
  %v747 = vpop.permute.xlu0 %746
  %748 = vset.pattern.permute.xlu0 0
  %749 = vperm.xlu0 %748, %v688
  %v750 = vpop.permute.xlu0 %749
  %751 = vset.pattern.permute.xlu0 0
  %752 = vperm.xlu0 %751, %v689
  %v753 = vpop.permute.xlu0 %752
  %754 = vset.pattern.permute.xlu0 0
  %755 = vperm.xlu0 %754, %v690
  %v756 = vpop.permute.xlu0 %755
  %757 = vset.pattern.permute.xlu0 0
  %758 = vperm.xlu0 %757, %v691
  %v759 = vpop.permute.xlu0 %758
  %760 = vset.pattern.permute.xlu0 0
  %761 = vperm.xlu0 %760, %v692
  %v762 = vpop.permute.xlu0 %761
  %763 = vset.pattern.permute.xlu0 0
  %764 = vperm.xlu0 %763, %v693
  %v765 = vpop.permute.xlu0 %764
  %766 = vset.pattern.permute.xlu0 0
  %767 = vperm.xlu0 %766, %v694
  %v768 = vpop.permute.xlu0 %767
  %769 = vset.pattern.permute.xlu0 0
  %770 = vperm.xlu0 %769, %v695
  %v771 = vpop.permute.xlu0 %770
  %772 = vset.pattern.permute.xlu0 0
  %773 = vperm.xlu0 %772, %v696
  %v774 = vpop.permute.xlu0 %773
  %775 = vset.pattern.permute.xlu0 0
  %776 = vperm.xlu0 %775, %v697
  %v777 = vpop.permute.xlu0 %776
  %778 = vset.pattern.permute.xlu0 0
  %779 = vperm.xlu0 %778, %v698
  %v780 = vpop.permute.xlu0 %779
  %781 = vset.pattern.permute.xlu0 0
  %782 = vperm.xlu0 %781, %v699
  %v783 = vpop.permute.xlu0 %782
  %784 = vset.pattern.permute.xlu0 0
  %785 = vperm.xlu0 %784, %v700
  %v786 = vpop.permute.xlu0 %785
  %787 = vset.pattern.permute.xlu0 0
  %788 = vperm.xlu0 %787, %v701
  %v789 = vpop.permute.xlu0 %788
  %790 = vset.pattern.permute.xlu0 0
  %791 = vperm.xlu0 %790, %v702
  %v792 = vpop.permute.xlu0 %791
  %793 = vset.pattern.permute.xlu0 0
  %794 = vperm.xlu0 %793, %v703
  %v795 = vpop.permute.xlu0 %794
  %796 = vset.pattern.permute.xlu0 0
  %797 = vperm.xlu0 %796, %v704
  %v798 = vpop.permute.xlu0 %797
  %799 = vset.pattern.permute.xlu0 0
  %800 = vperm.xlu0 %799, %v705
  %v801 = vpop.permute.xlu0 %800
  %vm802 = vcmp.eq.s32.totalorder %v708, %v46
  %vm803 = vcmp.eq.s32.totalorder %v711, %v46
  %vm804 = vcmp.eq.s32.totalorder %v714, %v46
  %vm805 = vcmp.eq.s32.totalorder %v717, %v46
  %vm806 = vcmp.eq.s32.totalorder %v720, %v46
  %vm807 = vcmp.eq.s32.totalorder %v723, %v46
  %vm808 = vcmp.eq.s32.totalorder %v726, %v46
  %vm809 = vcmp.eq.s32.totalorder %v729, %v46
  %vm810 = vcmp.eq.s32.totalorder %v732, %v46
  %vm811 = vcmp.eq.s32.totalorder %v735, %v46
  %vm812 = vcmp.eq.s32.totalorder %v738, %v46
  %vm813 = vcmp.eq.s32.totalorder %v741, %v46
  %vm814 = vcmp.eq.s32.totalorder %v744, %v46
  %vm815 = vcmp.eq.s32.totalorder %v747, %v46
  %vm816 = vcmp.eq.s32.totalorder %v750, %v46
  %vm817 = vcmp.eq.s32.totalorder %v753, %v46
  %vm818 = vcmp.eq.s32.totalorder %v756, %v46
  %vm819 = vcmp.eq.s32.totalorder %v759, %v46
  %vm820 = vcmp.eq.s32.totalorder %v762, %v46
  %vm821 = vcmp.eq.s32.totalorder %v765, %v46
  %vm822 = vcmp.eq.s32.totalorder %v768, %v46
  %vm823 = vcmp.eq.s32.totalorder %v771, %v46
  %vm824 = vcmp.eq.s32.totalorder %v774, %v46
  %vm825 = vcmp.eq.s32.totalorder %v777, %v46
  %vm826 = vcmp.eq.s32.totalorder %v780, %v46
  %vm827 = vcmp.eq.s32.totalorder %v783, %v46
  %vm828 = vcmp.eq.s32.totalorder %v786, %v46
  %vm829 = vcmp.eq.s32.totalorder %v789, %v46
  %vm830 = vcmp.eq.s32.totalorder %v792, %v46
  %vm831 = vcmp.eq.s32.totalorder %v795, %v46
  %vm832 = vcmp.eq.s32.totalorder %v798, %v46
  %vm833 = vcmp.eq.s32.totalorder %v801, %v46
  %v834 = vsel %vm802, 1.0, 0.0
  %v835 = vsel %vm803, 1.0, 0.0
  %v836 = vsel %vm804, 1.0, 0.0
  %v837 = vsel %vm805, 1.0, 0.0
  %v838 = vsel %vm806, 1.0, 0.0
  %v839 = vsel %vm807, 1.0, 0.0
  %v840 = vsel %vm808, 1.0, 0.0
  %v841 = vsel %vm809, 1.0, 0.0
  %v842 = vsel %vm810, 1.0, 0.0
  %v843 = vsel %vm811, 1.0, 0.0
  %v844 = vsel %vm812, 1.0, 0.0
  %v845 = vsel %vm813, 1.0, 0.0
  %v846 = vsel %vm814, 1.0, 0.0
  %v847 = vsel %vm815, 1.0, 0.0
  %v848 = vsel %vm816, 1.0, 0.0
  %v849 = vsel %vm817, 1.0, 0.0
  %v850 = vsel %vm818, 1.0, 0.0
  %v851 = vsel %vm819, 1.0, 0.0
  %v852 = vsel %vm820, 1.0, 0.0
  %v853 = vsel %vm821, 1.0, 0.0
  %v854 = vsel %vm822, 1.0, 0.0
  %v855 = vsel %vm823, 1.0, 0.0
  %v856 = vsel %vm824, 1.0, 0.0
  %v857 = vsel %vm825, 1.0, 0.0
  %v858 = vsel %vm826, 1.0, 0.0
  %v859 = vsel %vm827, 1.0, 0.0
  %v860 = vsel %vm828, 1.0, 0.0
  %v861 = vsel %vm829, 1.0, 0.0
  %v862 = vsel %vm830, 1.0, 0.0
  %v863 = vsel %vm831, 1.0, 0.0
  %v864 = vsel %vm832, 1.0, 0.0
  %v865 = vsel %vm833, 1.0, 0.0
  %v866 = vpack.c.bf16 %v835, %v834
  %v867 = vpack.c.bf16 %v837, %v836
  %v868 = vpack.c.bf16 %v839, %v838
  %v869 = vpack.c.bf16 %v841, %v840
  %v870 = vpack.c.bf16 %v843, %v842
  %v871 = vpack.c.bf16 %v845, %v844
  %v872 = vpack.c.bf16 %v847, %v846
  %v873 = vpack.c.bf16 %v849, %v848
  %v874 = vpack.c.bf16 %v851, %v850
  %v875 = vpack.c.bf16 %v853, %v852
  %v876 = vpack.c.bf16 %v855, %v854
  %v877 = vpack.c.bf16 %v857, %v856
  %v878 = vpack.c.bf16 %v859, %v858
  %v879 = vpack.c.bf16 %v861, %v860
  %v880 = vpack.c.bf16 %v863, %v862
  %v881 = vpack.c.bf16 %v865, %v864
  %s882 = scalar_lea.vmem %s0, 1024
  %v883 = vld [vmem:[%s882] sm:$0xff]
  %v884 = vld [vmem:[%s882 + $0x8] sm:$0xff]
  %v885 = vld [vmem:[%s882 + $0x10] sm:$0xff]
  %v886 = vld [vmem:[%s882 + $0x18] sm:$0xff]
  %v887 = vld [vmem:[%s882 + $0x20] sm:$0xff]
  %v888 = vld [vmem:[%s882 + $0x28] sm:$0xff]
  %v889 = vld [vmem:[%s882 + $0x30] sm:$0xff]
  %v890 = vld [vmem:[%s882 + $0x38] sm:$0xff]
  %v891 = vld [vmem:[%s882 + $0x40] sm:$0xff]
  %v892 = vld [vmem:[%s882 + $0x48] sm:$0xff]
  %v893 = vld [vmem:[%s882 + $0x50] sm:$0xff]
  %v894 = vld [vmem:[%s882 + $0x58] sm:$0xff]
  %v895 = vld [vmem:[%s882 + $0x60] sm:$0xff]
  %v896 = vld [vmem:[%s882 + $0x68] sm:$0xff]
  %v897 = vld [vmem:[%s882 + $0x70] sm:$0xff]
  %v898 = vld [vmem:[%s882 + $0x78] sm:$0xff]
  %v899 = vld [vmem:[%s882 + $0x80] sm:$0xff]
  %v900 = vld [vmem:[%s882 + $0x88] sm:$0xff]
  %v901 = vld [vmem:[%s882 + $0x90] sm:$0xff]
  %v902 = vld [vmem:[%s882 + $0x98] sm:$0xff]
  %v903 = vld [vmem:[%s882 + $0xa0] sm:$0xff]
  %v904 = vld [vmem:[%s882 + $0xa8] sm:$0xff]
  %v905 = vld [vmem:[%s882 + $0xb0] sm:$0xff]
  %v906 = vld [vmem:[%s882 + $0xb8] sm:$0xff]
  %v907 = vld [vmem:[%s882 + $0xc0] sm:$0xff]
  %v908 = vld [vmem:[%s882 + $0xc8] sm:$0xff]
  %v909 = vld [vmem:[%s882 + $0xd0] sm:$0xff]
  %v910 = vld [vmem:[%s882 + $0xd8] sm:$0xff]
  %v911 = vld [vmem:[%s882 + $0xe0] sm:$0xff]
  %v912 = vld [vmem:[%s882 + $0xe8] sm:$0xff]
  %v913 = vld [vmem:[%s882 + $0xf0] sm:$0xff]
  %v914 = vld [vmem:[%s882 + $0xf8] sm:$0xff]
  %915 = vset.pattern.permute.xlu0 0
  %916 = vperm.xlu0 %915, %v883
  %v917 = vpop.permute.xlu0 %916
  %918 = vset.pattern.permute.xlu0 0
  %919 = vperm.xlu0 %918, %v884
  %v920 = vpop.permute.xlu0 %919
  %921 = vset.pattern.permute.xlu0 0
  %922 = vperm.xlu0 %921, %v885
  %v923 = vpop.permute.xlu0 %922
  %924 = vset.pattern.permute.xlu0 0
  %925 = vperm.xlu0 %924, %v886
  %v926 = vpop.permute.xlu0 %925
  %927 = vset.pattern.permute.xlu0 0
  %928 = vperm.xlu0 %927, %v887
  %v929 = vpop.permute.xlu0 %928
  %930 = vset.pattern.permute.xlu0 0
  %931 = vperm.xlu0 %930, %v888
  %v932 = vpop.permute.xlu0 %931
  %933 = vset.pattern.permute.xlu0 0
  %934 = vperm.xlu0 %933, %v889
  %v935 = vpop.permute.xlu0 %934
  %936 = vset.pattern.permute.xlu0 0
  %937 = vperm.xlu0 %936, %v890
  %v938 = vpop.permute.xlu0 %937
  %939 = vset.pattern.permute.xlu0 0
  %940 = vperm.xlu0 %939, %v891
  %v941 = vpop.permute.xlu0 %940
  %942 = vset.pattern.permute.xlu0 0
  %943 = vperm.xlu0 %942, %v892
  %v944 = vpop.permute.xlu0 %943
  %945 = vset.pattern.permute.xlu0 0
  %946 = vperm.xlu0 %945, %v893
  %v947 = vpop.permute.xlu0 %946
  %948 = vset.pattern.permute.xlu0 0
  %949 = vperm.xlu0 %948, %v894
  %v950 = vpop.permute.xlu0 %949
  %951 = vset.pattern.permute.xlu0 0
  %952 = vperm.xlu0 %951, %v895
  %v953 = vpop.permute.xlu0 %952
  %954 = vset.pattern.permute.xlu0 0
  %955 = vperm.xlu0 %954, %v896
  %v956 = vpop.permute.xlu0 %955
  %957 = vset.pattern.permute.xlu0 0
  %958 = vperm.xlu0 %957, %v897
  %v959 = vpop.permute.xlu0 %958
  %960 = vset.pattern.permute.xlu0 0
  %961 = vperm.xlu0 %960, %v898
  %v962 = vpop.permute.xlu0 %961
  %963 = vset.pattern.permute.xlu0 0
  %964 = vperm.xlu0 %963, %v899
  %v965 = vpop.permute.xlu0 %964
  %966 = vset.pattern.permute.xlu0 0
  %967 = vperm.xlu0 %966, %v900
  %v968 = vpop.permute.xlu0 %967
  %969 = vset.pattern.permute.xlu0 0
  %970 = vperm.xlu0 %969, %v901
  %v971 = vpop.permute.xlu0 %970
  %972 = vset.pattern.permute.xlu0 0
  %973 = vperm.xlu0 %972, %v902
  %v974 = vpop.permute.xlu0 %973
  %975 = vset.pattern.permute.xlu0 0
  %976 = vperm.xlu0 %975, %v903
  %v977 = vpop.permute.xlu0 %976
  %978 = vset.pattern.permute.xlu0 0
  %979 = vperm.xlu0 %978, %v904
  %v980 = vpop.permute.xlu0 %979
  %981 = vset.pattern.permute.xlu0 0
  %982 = vperm.xlu0 %981, %v905
  %v983 = vpop.permute.xlu0 %982
  %984 = vset.pattern.permute.xlu0 0
  %985 = vperm.xlu0 %984, %v906
  %v986 = vpop.permute.xlu0 %985
  %987 = vset.pattern.permute.xlu0 0
  %988 = vperm.xlu0 %987, %v907
  %v989 = vpop.permute.xlu0 %988
  %990 = vset.pattern.permute.xlu0 0
  %991 = vperm.xlu0 %990, %v908
  %v992 = vpop.permute.xlu0 %991
  %993 = vset.pattern.permute.xlu0 0
  %994 = vperm.xlu0 %993, %v909
  %v995 = vpop.permute.xlu0 %994
  %996 = vset.pattern.permute.xlu0 0
  %997 = vperm.xlu0 %996, %v910
  %v998 = vpop.permute.xlu0 %997
  %999 = vset.pattern.permute.xlu0 0
  %1000 = vperm.xlu0 %999, %v911
  %v1001 = vpop.permute.xlu0 %1000
  %1002 = vset.pattern.permute.xlu0 0
  %1003 = vperm.xlu0 %1002, %v912
  %v1004 = vpop.permute.xlu0 %1003
  %1005 = vset.pattern.permute.xlu0 0
  %1006 = vperm.xlu0 %1005, %v913
  %v1007 = vpop.permute.xlu0 %1006
  %1008 = vset.pattern.permute.xlu0 0
  %1009 = vperm.xlu0 %1008, %v914
  %v1010 = vpop.permute.xlu0 %1009
  %vm1011 = vcmp.eq.s32.totalorder %v917, %v46
  %vm1012 = vcmp.eq.s32.totalorder %v920, %v46
  %vm1013 = vcmp.eq.s32.totalorder %v923, %v46
  %vm1014 = vcmp.eq.s32.totalorder %v926, %v46
  %vm1015 = vcmp.eq.s32.totalorder %v929, %v46
  %vm1016 = vcmp.eq.s32.totalorder %v932, %v46
  %vm1017 = vcmp.eq.s32.totalorder %v935, %v46
  %vm1018 = vcmp.eq.s32.totalorder %v938, %v46
  %vm1019 = vcmp.eq.s32.totalorder %v941, %v46
  %vm1020 = vcmp.eq.s32.totalorder %v944, %v46
  %vm1021 = vcmp.eq.s32.totalorder %v947, %v46
  %vm1022 = vcmp.eq.s32.totalorder %v950, %v46
  %vm1023 = vcmp.eq.s32.totalorder %v953, %v46
  %vm1024 = vcmp.eq.s32.totalorder %v956, %v46
  %vm1025 = vcmp.eq.s32.totalorder %v959, %v46
  %vm1026 = vcmp.eq.s32.totalorder %v962, %v46
  %vm1027 = vcmp.eq.s32.totalorder %v965, %v46
  %vm1028 = vcmp.eq.s32.totalorder %v968, %v46
  %vm1029 = vcmp.eq.s32.totalorder %v971, %v46
  %vm1030 = vcmp.eq.s32.totalorder %v974, %v46
  %vm1031 = vcmp.eq.s32.totalorder %v977, %v46
  %vm1032 = vcmp.eq.s32.totalorder %v980, %v46
  %vm1033 = vcmp.eq.s32.totalorder %v983, %v46
  %vm1034 = vcmp.eq.s32.totalorder %v986, %v46
  %vm1035 = vcmp.eq.s32.totalorder %v989, %v46
  %vm1036 = vcmp.eq.s32.totalorder %v992, %v46
  %vm1037 = vcmp.eq.s32.totalorder %v995, %v46
  %vm1038 = vcmp.eq.s32.totalorder %v998, %v46
  %vm1039 = vcmp.eq.s32.totalorder %v1001, %v46
  %vm1040 = vcmp.eq.s32.totalorder %v1004, %v46
  %vm1041 = vcmp.eq.s32.totalorder %v1007, %v46
  %vm1042 = vcmp.eq.s32.totalorder %v1010, %v46
  %v1043 = vsel %vm1011, 1.0, 0.0
  %v1044 = vsel %vm1012, 1.0, 0.0
  %v1045 = vsel %vm1013, 1.0, 0.0
  %v1046 = vsel %vm1014, 1.0, 0.0
  %v1047 = vsel %vm1015, 1.0, 0.0
  %v1048 = vsel %vm1016, 1.0, 0.0
  %v1049 = vsel %vm1017, 1.0, 0.0
  %v1050 = vsel %vm1018, 1.0, 0.0
  %v1051 = vsel %vm1019, 1.0, 0.0
  %v1052 = vsel %vm1020, 1.0, 0.0
  %v1053 = vsel %vm1021, 1.0, 0.0
  %v1054 = vsel %vm1022, 1.0, 0.0
  %v1055 = vsel %vm1023, 1.0, 0.0
  %v1056 = vsel %vm1024, 1.0, 0.0
  %v1057 = vsel %vm1025, 1.0, 0.0
  %v1058 = vsel %vm1026, 1.0, 0.0
  %v1059 = vsel %vm1027, 1.0, 0.0
  %v1060 = vsel %vm1028, 1.0, 0.0
  %v1061 = vsel %vm1029, 1.0, 0.0
  %v1062 = vsel %vm1030, 1.0, 0.0
  %v1063 = vsel %vm1031, 1.0, 0.0
  %v1064 = vsel %vm1032, 1.0, 0.0
  %v1065 = vsel %vm1033, 1.0, 0.0
  %v1066 = vsel %vm1034, 1.0, 0.0
  %v1067 = vsel %vm1035, 1.0, 0.0
  %v1068 = vsel %vm1036, 1.0, 0.0
  %v1069 = vsel %vm1037, 1.0, 0.0
  %v1070 = vsel %vm1038, 1.0, 0.0
  %v1071 = vsel %vm1039, 1.0, 0.0
  %v1072 = vsel %vm1040, 1.0, 0.0
  %v1073 = vsel %vm1041, 1.0, 0.0
  %v1074 = vsel %vm1042, 1.0, 0.0
  %v1075 = vpack.c.bf16 %v1044, %v1043
  %v1076 = vpack.c.bf16 %v1046, %v1045
  %v1077 = vpack.c.bf16 %v1048, %v1047
  %v1078 = vpack.c.bf16 %v1050, %v1049
  %v1079 = vpack.c.bf16 %v1052, %v1051
  %v1080 = vpack.c.bf16 %v1054, %v1053
  %v1081 = vpack.c.bf16 %v1056, %v1055
  %v1082 = vpack.c.bf16 %v1058, %v1057
  %v1083 = vpack.c.bf16 %v1060, %v1059
  %v1084 = vpack.c.bf16 %v1062, %v1061
  %v1085 = vpack.c.bf16 %v1064, %v1063
  %v1086 = vpack.c.bf16 %v1066, %v1065
  %v1087 = vpack.c.bf16 %v1068, %v1067
  %v1088 = vpack.c.bf16 %v1070, %v1069
  %v1089 = vpack.c.bf16 %v1072, %v1071
  %v1090 = vpack.c.bf16 %v1074, %v1073
  %v1091 = vld [vmem:[%s1] sm:$0xf]
  %v1092 = vld [vmem:[%s1 + $0x4] sm:$0xf]
  %v1093 = vld [vmem:[%s1 + $0x8] sm:$0xf]
  %v1094 = vld [vmem:[%s1 + $0xc] sm:$0xf]
  %v1095 = vld [vmem:[%s1 + $0x10] sm:$0xf]
  %v1096 = vld [vmem:[%s1 + $0x14] sm:$0xf]
  %v1097 = vld [vmem:[%s1 + $0x18] sm:$0xf]
  %v1098 = vld [vmem:[%s1 + $0x1c] sm:$0xf]
  %v1099 = vld [vmem:[%s1 + $0x20] sm:$0xf]
  %v1100 = vld [vmem:[%s1 + $0x24] sm:$0xf]
  %v1101 = vld [vmem:[%s1 + $0x28] sm:$0xf]
  %v1102 = vld [vmem:[%s1 + $0x2c] sm:$0xf]
  %v1103 = vld [vmem:[%s1 + $0x30] sm:$0xf]
  %v1104 = vld [vmem:[%s1 + $0x34] sm:$0xf]
  %v1105 = vld [vmem:[%s1 + $0x38] sm:$0xf]
  %v1106 = vld [vmem:[%s1 + $0x3c] sm:$0xf]
  %v1107 = vld [vmem:[%s1 + $0x40] sm:$0xf]
  %v1108 = vld [vmem:[%s1 + $0x44] sm:$0xf]
  %v1109 = vld [vmem:[%s1 + $0x48] sm:$0xf]
  %v1110 = vld [vmem:[%s1 + $0x4c] sm:$0xf]
  %v1111 = vld [vmem:[%s1 + $0x50] sm:$0xf]
  %v1112 = vld [vmem:[%s1 + $0x54] sm:$0xf]
  %v1113 = vld [vmem:[%s1 + $0x58] sm:$0xf]
  %v1114 = vld [vmem:[%s1 + $0x5c] sm:$0xf]
  %v1115 = vld [vmem:[%s1 + $0x60] sm:$0xf]
  %v1116 = vld [vmem:[%s1 + $0x64] sm:$0xf]
  %v1117 = vld [vmem:[%s1 + $0x68] sm:$0xf]
  %v1118 = vld [vmem:[%s1 + $0x6c] sm:$0xf]
  %v1119 = vld [vmem:[%s1 + $0x70] sm:$0xf]
  %v1120 = vld [vmem:[%s1 + $0x74] sm:$0xf]
  %v1121 = vld [vmem:[%s1 + $0x78] sm:$0xf]
  %v1122 = vld [vmem:[%s1 + $0x7c] sm:$0xf]
  %v1123 = vld [vmem:[%s1 + $0x80] sm:$0xf]
  %v1124 = vld [vmem:[%s1 + $0x84] sm:$0xf]
  %v1125 = vld [vmem:[%s1 + $0x88] sm:$0xf]
  %v1126 = vld [vmem:[%s1 + $0x8c] sm:$0xf]
  %v1127 = vld [vmem:[%s1 + $0x90] sm:$0xf]
  %v1128 = vld [vmem:[%s1 + $0x94] sm:$0xf]
  %v1129 = vld [vmem:[%s1 + $0x98] sm:$0xf]
  %v1130 = vld [vmem:[%s1 + $0x9c] sm:$0xf]
  %v1131 = vld [vmem:[%s1 + $0xa0] sm:$0xf]
  %v1132 = vld [vmem:[%s1 + $0xa4] sm:$0xf]
  %v1133 = vld [vmem:[%s1 + $0xa8] sm:$0xf]
  %v1134 = vld [vmem:[%s1 + $0xac] sm:$0xf]
  %v1135 = vld [vmem:[%s1 + $0xb0] sm:$0xf]
  %v1136 = vld [vmem:[%s1 + $0xb4] sm:$0xf]
  %v1137 = vld [vmem:[%s1 + $0xb8] sm:$0xf]
  %v1138 = vld [vmem:[%s1 + $0xbc] sm:$0xf]
  %v1139 = vld [vmem:[%s1 + $0xc0] sm:$0xf]
  %v1140 = vld [vmem:[%s1 + $0xc4] sm:$0xf]
  %v1141 = vld [vmem:[%s1 + $0xc8] sm:$0xf]
  %v1142 = vld [vmem:[%s1 + $0xcc] sm:$0xf]
  %v1143 = vld [vmem:[%s1 + $0xd0] sm:$0xf]
  %v1144 = vld [vmem:[%s1 + $0xd4] sm:$0xf]
  %v1145 = vld [vmem:[%s1 + $0xd8] sm:$0xf]
  %v1146 = vld [vmem:[%s1 + $0xdc] sm:$0xf]
  %v1147 = vld [vmem:[%s1 + $0xe0] sm:$0xf]
  %v1148 = vld [vmem:[%s1 + $0xe4] sm:$0xf]
  %v1149 = vld [vmem:[%s1 + $0xe8] sm:$0xf]
  %v1150 = vld [vmem:[%s1 + $0xec] sm:$0xf]
  %v1151 = vld [vmem:[%s1 + $0xf0] sm:$0xf]
  %v1152 = vld [vmem:[%s1 + $0xf4] sm:$0xf]
  %v1153 = vld [vmem:[%s1 + $0xf8] sm:$0xf]
  %v1154 = vld [vmem:[%s1 + $0xfc] sm:$0xf]
  %v1155 = vld [vmem:[%s1 + $0x100] sm:$0xf]
  %v1156 = vld [vmem:[%s1 + $0x104] sm:$0xf]
  %v1157 = vld [vmem:[%s1 + $0x108] sm:$0xf]
  %v1158 = vld [vmem:[%s1 + $0x10c] sm:$0xf]
  %v1159 = vld [vmem:[%s1 + $0x110] sm:$0xf]
  %v1160 = vld [vmem:[%s1 + $0x114] sm:$0xf]
  %v1161 = vld [vmem:[%s1 + $0x118] sm:$0xf]
  %v1162 = vld [vmem:[%s1 + $0x11c] sm:$0xf]
  %v1163 = vld [vmem:[%s1 + $0x120] sm:$0xf]
  %v1164 = vld [vmem:[%s1 + $0x124] sm:$0xf]
  %v1165 = vld [vmem:[%s1 + $0x128] sm:$0xf]
  %v1166 = vld [vmem:[%s1 + $0x12c] sm:$0xf]
  %v1167 = vld [vmem:[%s1 + $0x130] sm:$0xf]
  %v1168 = vld [vmem:[%s1 + $0x134] sm:$0xf]
  %v1169 = vld [vmem:[%s1 + $0x138] sm:$0xf]
  %v1170 = vld [vmem:[%s1 + $0x13c] sm:$0xf]
  %v1251 = vunpack.c.l.b16 %v1091
  %v1252 = vunpack.c.l.b16 %v1092
  %v1253 = vunpack.c.l.b16 %v1093
  %v1254 = vunpack.c.l.b16 %v1094
  %v1255 = vunpack.c.l.b16 %v1095
  %v1256 = vunpack.c.l.b16 %v1096
  %v1257 = vunpack.c.l.b16 %v1097
  %v1258 = vunpack.c.l.b16 %v1098
  %v1259 = vunpack.c.l.b16 %v1099
  %v1260 = vunpack.c.l.b16 %v1100
  %v1261 = vunpack.c.l.b16 %v1101
  %v1262 = vunpack.c.l.b16 %v1102
  %v1263 = vunpack.c.l.b16 %v1103
  %v1264 = vunpack.c.l.b16 %v1104
  %v1265 = vunpack.c.l.b16 %v1105
  %v1266 = vunpack.c.l.b16 %v1106
  %v1267 = vunpack.c.l.b16 %v1107
  %v1268 = vunpack.c.l.b16 %v1108
  %v1269 = vunpack.c.l.b16 %v1109
  %v1270 = vunpack.c.l.b16 %v1110
  %v1271 = vunpack.c.l.b16 %v1111
  %v1272 = vunpack.c.l.b16 %v1112
  %v1273 = vunpack.c.l.b16 %v1113
  %v1274 = vunpack.c.l.b16 %v1114
  %v1275 = vunpack.c.l.b16 %v1115
  %v1276 = vunpack.c.l.b16 %v1116
  %v1277 = vunpack.c.l.b16 %v1117
  %v1278 = vunpack.c.l.b16 %v1118
  %v1279 = vunpack.c.l.b16 %v1119
  %v1280 = vunpack.c.l.b16 %v1120
  %v1281 = vunpack.c.l.b16 %v1121
  %v1282 = vunpack.c.l.b16 %v1122
  %v1283 = vunpack.c.l.b16 %v1123
  %v1284 = vunpack.c.l.b16 %v1124
  %v1285 = vunpack.c.l.b16 %v1125
  %v1286 = vunpack.c.l.b16 %v1126
  %v1287 = vunpack.c.l.b16 %v1127
  %v1288 = vunpack.c.l.b16 %v1128
  %v1289 = vunpack.c.l.b16 %v1129
  %v1290 = vunpack.c.l.b16 %v1130
  %v1291 = vunpack.c.l.b16 %v1131
  %v1292 = vunpack.c.l.b16 %v1132
  %v1293 = vunpack.c.l.b16 %v1133
  %v1294 = vunpack.c.l.b16 %v1134
  %v1295 = vunpack.c.l.b16 %v1135
  %v1296 = vunpack.c.l.b16 %v1136
  %v1297 = vunpack.c.l.b16 %v1137
  %v1298 = vunpack.c.l.b16 %v1138
  %v1299 = vunpack.c.l.b16 %v1139
  %v1300 = vunpack.c.l.b16 %v1140
  %v1301 = vunpack.c.l.b16 %v1141
  %v1302 = vunpack.c.l.b16 %v1142
  %v1303 = vunpack.c.l.b16 %v1143
  %v1304 = vunpack.c.l.b16 %v1144
  %v1305 = vunpack.c.l.b16 %v1145
  %v1306 = vunpack.c.l.b16 %v1146
  %v1307 = vunpack.c.l.b16 %v1147
  %v1308 = vunpack.c.l.b16 %v1148
  %v1309 = vunpack.c.l.b16 %v1149
  %v1310 = vunpack.c.l.b16 %v1150
  %v1311 = vunpack.c.l.b16 %v1151
  %v1312 = vunpack.c.l.b16 %v1152
  %v1313 = vunpack.c.l.b16 %v1153
  %v1314 = vunpack.c.l.b16 %v1154
  %v1315 = vunpack.c.l.b16 %v1155
  %v1316 = vunpack.c.l.b16 %v1156
  %v1317 = vunpack.c.l.b16 %v1157
  %v1318 = vunpack.c.l.b16 %v1158
  %v1319 = vunpack.c.l.b16 %v1159
  %v1320 = vunpack.c.l.b16 %v1160
  %v1321 = vunpack.c.l.b16 %v1161
  %v1322 = vunpack.c.l.b16 %v1162
  %v1323 = vunpack.c.l.b16 %v1163
  %v1324 = vunpack.c.l.b16 %v1164
  %v1325 = vunpack.c.l.b16 %v1165
  %v1326 = vunpack.c.l.b16 %v1166
  %v1327 = vunpack.c.l.b16 %v1167
  %v1328 = vunpack.c.l.b16 %v1168
  %v1329 = vunpack.c.l.b16 %v1169
  %v1330 = vunpack.c.l.b16 %v1170
  %v1331 = vpack.c.b16 %v1252, %v1251
  %v1332 = vpack.c.b16 %v1254, %v1253
  %v1333 = vpack.c.b16 %v1256, %v1255
  %v1334 = vpack.c.b16 %v1258, %v1257
  %v1335 = vpack.c.b16 %v1260, %v1259
  %v1336 = vpack.c.b16 %v1262, %v1261
  %v1337 = vpack.c.b16 %v1264, %v1263
  %v1338 = vpack.c.b16 %v1266, %v1265
  %v1339 = vpack.c.b16 %v1268, %v1267
  %v1340 = vpack.c.b16 %v1270, %v1269
  %v1341 = vpack.c.b16 %v1272, %v1271
  %v1342 = vpack.c.b16 %v1274, %v1273
  %v1343 = vpack.c.b16 %v1276, %v1275
  %v1344 = vpack.c.b16 %v1278, %v1277
  %v1345 = vpack.c.b16 %v1280, %v1279
  %v1346 = vpack.c.b16 %v1282, %v1281
  %v1347 = vpack.c.b16 %v1284, %v1283
  %v1348 = vpack.c.b16 %v1286, %v1285
  %v1349 = vpack.c.b16 %v1288, %v1287
  %v1350 = vpack.c.b16 %v1290, %v1289
  %v1351 = vpack.c.b16 %v1292, %v1291
  %v1352 = vpack.c.b16 %v1294, %v1293
  %v1353 = vpack.c.b16 %v1296, %v1295
  %v1354 = vpack.c.b16 %v1298, %v1297
  %v1355 = vpack.c.b16 %v1300, %v1299
  %v1356 = vpack.c.b16 %v1302, %v1301
  %v1357 = vpack.c.b16 %v1304, %v1303
  %v1358 = vpack.c.b16 %v1306, %v1305
  %v1359 = vpack.c.b16 %v1308, %v1307
  %v1360 = vpack.c.b16 %v1310, %v1309
  %v1361 = vpack.c.b16 %v1312, %v1311
  %v1362 = vpack.c.b16 %v1314, %v1313
  %v1363 = vpack.c.b16 %v1316, %v1315
  %v1364 = vpack.c.b16 %v1318, %v1317
  %v1365 = vpack.c.b16 %v1320, %v1319
  %v1366 = vpack.c.b16 %v1322, %v1321
  %v1367 = vpack.c.b16 %v1324, %v1323
  %v1368 = vpack.c.b16 %v1326, %v1325
  %v1369 = vpack.c.b16 %v1328, %v1327
  %v1370 = vpack.c.b16 %v1330, %v1329
  %1411 = vmatprep.subr.bf16.mxu0 0
  %1412 = vmatpush1.bf16.msra.mxu0 %v1338
  %1413 = vmatprep.subr.bf16.mxu0 0
  %1414 = vmatpush1.bf16.msra.mxu0 %v1337
  %1415 = vmatprep.subr.bf16.mxu0 0
  %1416 = vmatpush1.bf16.msra.mxu0 %v1336
  %1417 = vmatprep.subr.bf16.mxu0 0
  %1418 = vmatpush1.bf16.msra.mxu0 %v1335
  %1419 = vmatprep.subr.bf16.mxu0 0
  %1420 = vmatpush1.bf16.msra.mxu0 %v1334
  %1421 = vmatprep.subr.bf16.mxu0 0
  %1422 = vmatpush1.bf16.msra.mxu0 %v1333
  %1423 = vmatprep.subr.bf16.mxu0 0
  %1424 = vmatpush1.bf16.msra.mxu0 %v1332
  %1425 = vmatprep.subr.bf16.mxu0 0
  %1426 = vmatpush1.bf16.msra.mxu0 %v1331
  %1427 = vmatprep.subr.bf16.mxu0 0
  %1428 = vmatpush2.bf16.msra.mxu0 %v1346
  %1429 = vmatprep.subr.bf16.mxu0 0
  %1430 = vmatpush2.bf16.msra.mxu0 %v1345
  %1431 = vmatprep.subr.bf16.mxu0 0
  %1432 = vmatpush2.bf16.msra.mxu0 %v1344
  %1433 = vmatprep.subr.bf16.mxu0 0
  %1434 = vmatpush2.bf16.msra.mxu0 %v1343
  %1435 = vmatprep.subr.bf16.mxu0 0
  %1436 = vmatpush2.bf16.msra.mxu0 %v1342
  %1437 = vmatprep.subr.bf16.mxu0 0
  %1438 = vmatpush2.bf16.msra.mxu0 %v1341
  %1439 = vmatprep.subr.bf16.mxu0 0
  %1440 = vmatpush2.bf16.msra.mxu0 %v1340
  %1441 = vmatprep.subr.bf16.mxu0 0
  %1442 = vmatpush2.bf16.msra.mxu0 %v1339
  %1443 = vmatprep.mubr.bf16.mxu0 %v448
  %1444 = vmatmul.mubr.bf16.gmra.mxu0 %v239
  %v1445 = vpop.f32.mrf.mxu0
  %v1446 = vadd.f32 0.0, %v1445
  %v1447 = vpop.f32.mrf.mxu0
  %v1448 = vpop.f32.mrf.mxu0
  %v1449 = vadd.f32 0.0, %v1448
  %v1450 = vpop.f32.mrf.mxu0
  %1451 = vmatprep.mubr.bf16.mxu0 %v449
  %1452 = vmatmul.mubr.bf16.gmra.mxu0 %v240
  %v1453 = vpop.f32.mrf.mxu0
  %v1454 = vadd.f32 0.0, %v1453
  %v1455 = vpop.f32.mrf.mxu0
  %v1456 = vpop.f32.mrf.mxu0
  %v1457 = vadd.f32 0.0, %v1456
  %v1458 = vpop.f32.mrf.mxu0
  %1459 = vmatprep.mubr.bf16.mxu0 %v450
  %1460 = vmatmul.mubr.bf16.gmra.mxu0 %v241
  %v1461 = vpop.f32.mrf.mxu0
  %v1462 = vadd.f32 0.0, %v1461
  %v1463 = vpop.f32.mrf.mxu0
  %v1464 = vpop.f32.mrf.mxu0
  %v1465 = vadd.f32 0.0, %v1464
  %v1466 = vpop.f32.mrf.mxu0
  %1467 = vmatprep.mubr.bf16.mxu0 %v451
  %1468 = vmatmul.mubr.bf16.gmra.mxu0 %v242
  %v1469 = vpop.f32.mrf.mxu0
  %v1470 = vadd.f32 0.0, %v1469
  %v1471 = vpop.f32.mrf.mxu0
  %v1472 = vpop.f32.mrf.mxu0
  %v1473 = vadd.f32 0.0, %v1472
  %v1474 = vpop.f32.mrf.mxu0
  %1475 = vmatprep.mubr.bf16.mxu0 %v452
  %1476 = vmatmul.mubr.bf16.gmra.mxu0 %v243
  %v1477 = vpop.f32.mrf.mxu0
  %v1478 = vadd.f32 0.0, %v1477
  %v1479 = vpop.f32.mrf.mxu0
  %v1480 = vpop.f32.mrf.mxu0
  %v1481 = vadd.f32 0.0, %v1480
  %v1482 = vpop.f32.mrf.mxu0
  %1483 = vmatprep.mubr.bf16.mxu0 %v453
  %1484 = vmatmul.mubr.bf16.gmra.mxu0 %v244
  %v1485 = vpop.f32.mrf.mxu0
  %v1486 = vadd.f32 0.0, %v1485
  %v1487 = vpop.f32.mrf.mxu0
  %v1488 = vpop.f32.mrf.mxu0
  %v1489 = vadd.f32 0.0, %v1488
  %v1490 = vpop.f32.mrf.mxu0
  %1491 = vmatprep.mubr.bf16.mxu0 %v454
  %1492 = vmatmul.mubr.bf16.gmra.mxu0 %v245
  %v1493 = vpop.f32.mrf.mxu0
  %v1494 = vadd.f32 0.0, %v1493
  %v1495 = vpop.f32.mrf.mxu0
  %v1496 = vpop.f32.mrf.mxu0
  %v1497 = vadd.f32 0.0, %v1496
  %v1498 = vpop.f32.mrf.mxu0
  %1499 = vmatprep.mubr.bf16.mxu0 %v455
  %1500 = vmatmul.mubr.bf16.gmra.mxu0 %v246
  %v1501 = vpop.f32.mrf.mxu0
  %v1502 = vadd.f32 0.0, %v1501
  %v1503 = vpop.f32.mrf.mxu0
  %v1504 = vpop.f32.mrf.mxu0
  %v1505 = vadd.f32 0.0, %v1504
  %v1506 = vpop.f32.mrf.mxu0
  %1507 = vmatprep.mubr.bf16.mxu0 %v456
  %1508 = vmatmul.mubr.bf16.gmra.mxu0 %v247
  %v1509 = vpop.f32.mrf.mxu0
  %v1510 = vadd.f32 0.0, %v1509
  %v1511 = vpop.f32.mrf.mxu0
  %v1512 = vpop.f32.mrf.mxu0
  %v1513 = vadd.f32 0.0, %v1512
  %v1514 = vpop.f32.mrf.mxu0
  %1515 = vmatprep.mubr.bf16.mxu0 %v457
  %1516 = vmatmul.mubr.bf16.gmra.mxu0 %v248
  %v1517 = vpop.f32.mrf.mxu0
  %v1518 = vadd.f32 0.0, %v1517
  %v1519 = vpop.f32.mrf.mxu0
  %v1520 = vpop.f32.mrf.mxu0
  %v1521 = vadd.f32 0.0, %v1520
  %v1522 = vpop.f32.mrf.mxu0
  %1523 = vmatprep.mubr.bf16.mxu0 %v458
  %1524 = vmatmul.mubr.bf16.gmra.mxu0 %v249
  %v1525 = vpop.f32.mrf.mxu0
  %v1526 = vadd.f32 0.0, %v1525
  %v1527 = vpop.f32.mrf.mxu0
  %v1528 = vpop.f32.mrf.mxu0
  %v1529 = vadd.f32 0.0, %v1528
  %v1530 = vpop.f32.mrf.mxu0
  %1531 = vmatprep.mubr.bf16.mxu0 %v459
  %1532 = vmatmul.mubr.bf16.gmra.mxu0 %v250
  %v1533 = vpop.f32.mrf.mxu0
  %v1534 = vadd.f32 0.0, %v1533
  %v1535 = vpop.f32.mrf.mxu0
  %v1536 = vpop.f32.mrf.mxu0
  %v1537 = vadd.f32 0.0, %v1536
  %v1538 = vpop.f32.mrf.mxu0
  %1539 = vmatprep.mubr.bf16.mxu0 %v460
  %1540 = vmatmul.mubr.bf16.gmra.mxu0 %v251
  %v1541 = vpop.f32.mrf.mxu0
  %v1542 = vadd.f32 0.0, %v1541
  %v1543 = vpop.f32.mrf.mxu0
  %v1544 = vpop.f32.mrf.mxu0
  %v1545 = vadd.f32 0.0, %v1544
  %v1546 = vpop.f32.mrf.mxu0
  %1547 = vmatprep.mubr.bf16.mxu0 %v461
  %1548 = vmatmul.mubr.bf16.gmra.mxu0 %v252
  %v1549 = vpop.f32.mrf.mxu0
  %v1550 = vadd.f32 0.0, %v1549
  %v1551 = vpop.f32.mrf.mxu0
  %v1552 = vpop.f32.mrf.mxu0
  %v1553 = vadd.f32 0.0, %v1552
  %v1554 = vpop.f32.mrf.mxu0
  %1555 = vmatprep.mubr.bf16.mxu0 %v462
  %1556 = vmatmul.mubr.bf16.gmra.mxu0 %v253
  %v1557 = vpop.f32.mrf.mxu0
  %v1558 = vadd.f32 0.0, %v1557
  %v1559 = vpop.f32.mrf.mxu0
  %v1560 = vpop.f32.mrf.mxu0
  %v1561 = vadd.f32 0.0, %v1560
  %v1562 = vpop.f32.mrf.mxu0
  %1563 = vmatprep.mubr.bf16.mxu0 %v463
  %1564 = vmatmul.mubr.bf16.gmra.mxu0 %v254
  %v1565 = vpop.f32.mrf.mxu0
  %v1566 = vadd.f32 0.0, %v1565
  %v1567 = vpop.f32.mrf.mxu0
  %v1568 = vpop.f32.mrf.mxu0
  %v1569 = vadd.f32 0.0, %v1568
  %v1570 = vpop.f32.mrf.mxu0
  %1571 = vdwg.mxu0
  %1572 = vmatprep.subr.bf16.mxu0 0
  %1573 = vmatpush1.bf16.msra.mxu0 %v1354
  %1574 = vmatprep.subr.bf16.mxu0 0
  %1575 = vmatpush1.bf16.msra.mxu0 %v1353
  %1576 = vmatprep.subr.bf16.mxu0 0
  %1577 = vmatpush1.bf16.msra.mxu0 %v1352
  %1578 = vmatprep.subr.bf16.mxu0 0
  %1579 = vmatpush1.bf16.msra.mxu0 %v1351
  %1580 = vmatprep.subr.bf16.mxu0 0
  %1581 = vmatpush1.bf16.msra.mxu0 %v1350
  %1582 = vmatprep.subr.bf16.mxu0 0
  %1583 = vmatpush1.bf16.msra.mxu0 %v1349
  %1584 = vmatprep.subr.bf16.mxu0 0
  %1585 = vmatpush1.bf16.msra.mxu0 %v1348
  %1586 = vmatprep.subr.bf16.mxu0 0
  %1587 = vmatpush1.bf16.msra.mxu0 %v1347
  %1588 = vmatprep.subr.bf16.mxu0 0
  %1589 = vmatpush2.bf16.msra.mxu0 %v1362
  %1590 = vmatprep.subr.bf16.mxu0 0
  %1591 = vmatpush2.bf16.msra.mxu0 %v1361
  %1592 = vmatprep.subr.bf16.mxu0 0
  %1593 = vmatpush2.bf16.msra.mxu0 %v1360
  %1594 = vmatprep.subr.bf16.mxu0 0
  %1595 = vmatpush2.bf16.msra.mxu0 %v1359
  %1596 = vmatprep.subr.bf16.mxu0 0
  %1597 = vmatpush2.bf16.msra.mxu0 %v1358
  %1598 = vmatprep.subr.bf16.mxu0 0
  %1599 = vmatpush2.bf16.msra.mxu0 %v1357
  %1600 = vmatprep.subr.bf16.mxu0 0
  %1601 = vmatpush2.bf16.msra.mxu0 %v1356
  %1602 = vmatprep.subr.bf16.mxu0 0
  %1603 = vmatpush2.bf16.msra.mxu0 %v1355
  %1604 = vmatprep.mubr.bf16.mxu0 %v866
  %1605 = vmatmul.mubr.bf16.gmra.mxu0 %v657
  %v1606 = vpop.f32.mrf.mxu0
  %v1607 = vadd.f32 %v1446, %v1606
  %v1608 = vpop.f32.mrf.mxu0
  %v1609 = vpop.f32.mrf.mxu0
  %v1610 = vadd.f32 %v1449, %v1609
  %v1611 = vpop.f32.mrf.mxu0
  %1612 = vmatprep.mubr.bf16.mxu0 %v867
  %1613 = vmatmul.mubr.bf16.gmra.mxu0 %v658
  %v1614 = vpop.f32.mrf.mxu0
  %v1615 = vadd.f32 %v1454, %v1614
  %v1616 = vpop.f32.mrf.mxu0
  %v1617 = vpop.f32.mrf.mxu0
  %v1618 = vadd.f32 %v1457, %v1617
  %v1619 = vpop.f32.mrf.mxu0
  %1620 = vmatprep.mubr.bf16.mxu0 %v868
  %1621 = vmatmul.mubr.bf16.gmra.mxu0 %v659
  %v1622 = vpop.f32.mrf.mxu0
  %v1623 = vadd.f32 %v1462, %v1622
  %v1624 = vpop.f32.mrf.mxu0
  %v1625 = vpop.f32.mrf.mxu0
  %v1626 = vadd.f32 %v1465, %v1625
  %v1627 = vpop.f32.mrf.mxu0
  %1628 = vmatprep.mubr.bf16.mxu0 %v869
  %1629 = vmatmul.mubr.bf16.gmra.mxu0 %v660
  %v1630 = vpop.f32.mrf.mxu0
  %v1631 = vadd.f32 %v1470, %v1630
  %v1632 = vpop.f32.mrf.mxu0
  %v1633 = vpop.f32.mrf.mxu0
  %v1634 = vadd.f32 %v1473, %v1633
  %v1635 = vpop.f32.mrf.mxu0
  %1636 = vmatprep.mubr.bf16.mxu0 %v870
  %1637 = vmatmul.mubr.bf16.gmra.mxu0 %v661
  %v1638 = vpop.f32.mrf.mxu0
  %v1639 = vadd.f32 %v1478, %v1638
  %v1640 = vpop.f32.mrf.mxu0
  %v1641 = vpop.f32.mrf.mxu0
  %v1642 = vadd.f32 %v1481, %v1641
  %v1643 = vpop.f32.mrf.mxu0
  %1644 = vmatprep.mubr.bf16.mxu0 %v871
  %1645 = vmatmul.mubr.bf16.gmra.mxu0 %v662
  %v1646 = vpop.f32.mrf.mxu0
  %v1647 = vadd.f32 %v1486, %v1646
  %v1648 = vpop.f32.mrf.mxu0
  %v1649 = vpop.f32.mrf.mxu0
  %v1650 = vadd.f32 %v1489, %v1649
  %v1651 = vpop.f32.mrf.mxu0
  %1652 = vmatprep.mubr.bf16.mxu0 %v872
  %1653 = vmatmul.mubr.bf16.gmra.mxu0 %v663
  %v1654 = vpop.f32.mrf.mxu0
  %v1655 = vadd.f32 %v1494, %v1654
  %v1656 = vpop.f32.mrf.mxu0
  %v1657 = vpop.f32.mrf.mxu0
  %v1658 = vadd.f32 %v1497, %v1657
  %v1659 = vpop.f32.mrf.mxu0
  %1660 = vmatprep.mubr.bf16.mxu0 %v873
  %1661 = vmatmul.mubr.bf16.gmra.mxu0 %v664
  %v1662 = vpop.f32.mrf.mxu0
  %v1663 = vadd.f32 %v1502, %v1662
  %v1664 = vpop.f32.mrf.mxu0
  %v1665 = vpop.f32.mrf.mxu0
  %v1666 = vadd.f32 %v1505, %v1665
  %v1667 = vpop.f32.mrf.mxu0
  %1668 = vmatprep.mubr.bf16.mxu0 %v874
  %1669 = vmatmul.mubr.bf16.gmra.mxu0 %v665
  %v1670 = vpop.f32.mrf.mxu0
  %v1671 = vadd.f32 %v1510, %v1670
  %v1672 = vpop.f32.mrf.mxu0
  %v1673 = vpop.f32.mrf.mxu0
  %v1674 = vadd.f32 %v1513, %v1673
  %v1675 = vpop.f32.mrf.mxu0
  %1676 = vmatprep.mubr.bf16.mxu0 %v875
  %1677 = vmatmul.mubr.bf16.gmra.mxu0 %v666
  %v1678 = vpop.f32.mrf.mxu0
  %v1679 = vadd.f32 %v1518, %v1678
  %v1680 = vpop.f32.mrf.mxu0
  %v1681 = vpop.f32.mrf.mxu0
  %v1682 = vadd.f32 %v1521, %v1681
  %v1683 = vpop.f32.mrf.mxu0
  %1684 = vmatprep.mubr.bf16.mxu0 %v876
  %1685 = vmatmul.mubr.bf16.gmra.mxu0 %v667
  %v1686 = vpop.f32.mrf.mxu0
  %v1687 = vadd.f32 %v1526, %v1686
  %v1688 = vpop.f32.mrf.mxu0
  %v1689 = vpop.f32.mrf.mxu0
  %v1690 = vadd.f32 %v1529, %v1689
  %v1691 = vpop.f32.mrf.mxu0
  %1692 = vmatprep.mubr.bf16.mxu0 %v877
  %1693 = vmatmul.mubr.bf16.gmra.mxu0 %v668
  %v1694 = vpop.f32.mrf.mxu0
  %v1695 = vadd.f32 %v1534, %v1694
  %v1696 = vpop.f32.mrf.mxu0
  %v1697 = vpop.f32.mrf.mxu0
  %v1698 = vadd.f32 %v1537, %v1697
  %v1699 = vpop.f32.mrf.mxu0
  %1700 = vmatprep.mubr.bf16.mxu0 %v878
  %1701 = vmatmul.mubr.bf16.gmra.mxu0 %v669
  %v1702 = vpop.f32.mrf.mxu0
  %v1703 = vadd.f32 %v1542, %v1702
  %v1704 = vpop.f32.mrf.mxu0
  %v1705 = vpop.f32.mrf.mxu0
  %v1706 = vadd.f32 %v1545, %v1705
  %v1707 = vpop.f32.mrf.mxu0
  %1708 = vmatprep.mubr.bf16.mxu0 %v879
  %1709 = vmatmul.mubr.bf16.gmra.mxu0 %v670
  %v1710 = vpop.f32.mrf.mxu0
  %v1711 = vadd.f32 %v1550, %v1710
  %v1712 = vpop.f32.mrf.mxu0
  %v1713 = vpop.f32.mrf.mxu0
  %v1714 = vadd.f32 %v1553, %v1713
  %v1715 = vpop.f32.mrf.mxu0
  %1716 = vmatprep.mubr.bf16.mxu0 %v880
  %1717 = vmatmul.mubr.bf16.gmra.mxu0 %v671
  %v1718 = vpop.f32.mrf.mxu0
  %v1719 = vadd.f32 %v1558, %v1718
  %v1720 = vpop.f32.mrf.mxu0
  %v1721 = vpop.f32.mrf.mxu0
  %v1722 = vadd.f32 %v1561, %v1721
  %v1723 = vpop.f32.mrf.mxu0
  %1724 = vmatprep.mubr.bf16.mxu0 %v881
  %1725 = vmatmul.mubr.bf16.gmra.mxu0 %v672
  %v1726 = vpop.f32.mrf.mxu0
  %v1727 = vadd.f32 %v1566, %v1726
  %v1728 = vpop.f32.mrf.mxu0
  %v1729 = vpop.f32.mrf.mxu0
  %v1730 = vadd.f32 %v1569, %v1729
  %v1731 = vpop.f32.mrf.mxu0
  %1732 = vdwg.mxu0
  %1733 = vmatprep.subr.bf16.mxu0 0
  %1734 = vmatpush1.bf16.msra.mxu0 %v1370
  %1735 = vmatprep.subr.bf16.mxu0 0
  %1736 = vmatpush1.bf16.msra.mxu0 %v1369
  %1737 = vmatprep.subr.bf16.mxu0 0
  %1738 = vmatpush1.bf16.msra.mxu0 %v1368
  %1739 = vmatprep.subr.bf16.mxu0 0
  %1740 = vmatpush1.bf16.msra.mxu0 %v1367
  %1741 = vmatprep.subr.bf16.mxu0 0
  %1742 = vmatpush1.bf16.msra.mxu0 %v1366
  %1743 = vmatprep.subr.bf16.mxu0 0
  %1744 = vmatpush1.bf16.msra.mxu0 %v1365
  %1745 = vmatprep.subr.bf16.mxu0 0
  %1746 = vmatpush1.bf16.msra.mxu0 %v1364
  %1747 = vmatprep.subr.bf16.mxu0 0
  %1748 = vmatpush1.bf16.msra.mxu0 %v1363
  %1749 = vmatprep.subr.bf16.mxu0 0
  %1750 = vmatpush2.bf16.msra.mxu0 0
  %1751 = vmatprep.subr.bf16.mxu0 0
  %1752 = vmatpush2.bf16.msra.mxu0 0
  %1753 = vmatprep.subr.bf16.mxu0 0
  %1754 = vmatpush2.bf16.msra.mxu0 0
  %1755 = vmatprep.subr.bf16.mxu0 0
  %1756 = vmatpush2.bf16.msra.mxu0 0
  %1757 = vmatprep.subr.bf16.mxu0 0
  %1758 = vmatpush2.bf16.msra.mxu0 0
  %1759 = vmatprep.subr.bf16.mxu0 0
  %1760 = vmatpush2.bf16.msra.mxu0 0
  %1761 = vmatprep.subr.bf16.mxu0 0
  %1762 = vmatpush2.bf16.msra.mxu0 0
  %1763 = vmatprep.subr.bf16.mxu0 0
  %1764 = vmatpush2.bf16.msra.mxu0 0
  %1765 = vmatprep.mubr.bf16.mxu0 0
  %1766 = vmatmul.mubr.bf16.gmra.mxu0 %v1075
  %v1767 = vpop.f32.mrf.mxu0
  %v1768 = vadd.f32 %v1607, %v1767
  %v1769 = vpop.f32.mrf.mxu0
  %v1770 = vpop.f32.mrf.mxu0
  %v1771 = vadd.f32 %v1610, %v1770
  %v1772 = vpop.f32.mrf.mxu0
  %1773 = vmatprep.mubr.bf16.mxu0 0
  %1774 = vmatmul.mubr.bf16.gmra.mxu0 %v1076
  %v1775 = vpop.f32.mrf.mxu0
  %v1776 = vadd.f32 %v1615, %v1775
  %v1777 = vpop.f32.mrf.mxu0
  %v1778 = vpop.f32.mrf.mxu0
  %v1779 = vadd.f32 %v1618, %v1778
  %v1780 = vpop.f32.mrf.mxu0
  %1781 = vmatprep.mubr.bf16.mxu0 0
  %1782 = vmatmul.mubr.bf16.gmra.mxu0 %v1077
  %v1783 = vpop.f32.mrf.mxu0
  %v1784 = vadd.f32 %v1623, %v1783
  %v1785 = vpop.f32.mrf.mxu0
  %v1786 = vpop.f32.mrf.mxu0
  %v1787 = vadd.f32 %v1626, %v1786
  %v1788 = vpop.f32.mrf.mxu0
  %1789 = vmatprep.mubr.bf16.mxu0 0
  %1790 = vmatmul.mubr.bf16.gmra.mxu0 %v1078
  %v1791 = vpop.f32.mrf.mxu0
  %v1792 = vadd.f32 %v1631, %v1791
  %v1793 = vpop.f32.mrf.mxu0
  %v1794 = vpop.f32.mrf.mxu0
  %v1795 = vadd.f32 %v1634, %v1794
  %v1796 = vpop.f32.mrf.mxu0
  %1797 = vmatprep.mubr.bf16.mxu0 0
  %1798 = vmatmul.mubr.bf16.gmra.mxu0 %v1079
  %v1799 = vpop.f32.mrf.mxu0
  %v1800 = vadd.f32 %v1639, %v1799
  %v1801 = vpop.f32.mrf.mxu0
  %v1802 = vpop.f32.mrf.mxu0
  %v1803 = vadd.f32 %v1642, %v1802
  %v1804 = vpop.f32.mrf.mxu0
  %1805 = vmatprep.mubr.bf16.mxu0 0
  %1806 = vmatmul.mubr.bf16.gmra.mxu0 %v1080
  %v1807 = vpop.f32.mrf.mxu0
  %v1808 = vadd.f32 %v1647, %v1807
  %v1809 = vpop.f32.mrf.mxu0
  %v1810 = vpop.f32.mrf.mxu0
  %v1811 = vadd.f32 %v1650, %v1810
  %v1812 = vpop.f32.mrf.mxu0
  %1813 = vmatprep.mubr.bf16.mxu0 0
  %1814 = vmatmul.mubr.bf16.gmra.mxu0 %v1081
  %v1815 = vpop.f32.mrf.mxu0
  %v1816 = vadd.f32 %v1655, %v1815
  %v1817 = vpop.f32.mrf.mxu0
  %v1818 = vpop.f32.mrf.mxu0
  %v1819 = vadd.f32 %v1658, %v1818
  %v1820 = vpop.f32.mrf.mxu0
  %1821 = vmatprep.mubr.bf16.mxu0 0
  %1822 = vmatmul.mubr.bf16.gmra.mxu0 %v1082
  %v1823 = vpop.f32.mrf.mxu0
  %v1824 = vadd.f32 %v1663, %v1823
  %v1825 = vpop.f32.mrf.mxu0
  %v1826 = vpop.f32.mrf.mxu0
  %v1827 = vadd.f32 %v1666, %v1826
  %v1828 = vpop.f32.mrf.mxu0
  %1829 = vmatprep.mubr.bf16.mxu0 0
  %1830 = vmatmul.mubr.bf16.gmra.mxu0 %v1083
  %v1831 = vpop.f32.mrf.mxu0
  %v1832 = vadd.f32 %v1671, %v1831
  %v1833 = vpop.f32.mrf.mxu0
  %v1834 = vpop.f32.mrf.mxu0
  %v1835 = vadd.f32 %v1674, %v1834
  %v1836 = vpop.f32.mrf.mxu0
  %1837 = vmatprep.mubr.bf16.mxu0 0
  %1838 = vmatmul.mubr.bf16.gmra.mxu0 %v1084
  %v1839 = vpop.f32.mrf.mxu0
  %v1840 = vadd.f32 %v1679, %v1839
  %v1841 = vpop.f32.mrf.mxu0
  %v1842 = vpop.f32.mrf.mxu0
  %v1843 = vadd.f32 %v1682, %v1842
  %v1844 = vpop.f32.mrf.mxu0
  %1845 = vmatprep.mubr.bf16.mxu0 0
  %1846 = vmatmul.mubr.bf16.gmra.mxu0 %v1085
  %v1847 = vpop.f32.mrf.mxu0
  %v1848 = vadd.f32 %v1687, %v1847
  %v1849 = vpop.f32.mrf.mxu0
  %v1850 = vpop.f32.mrf.mxu0
  %v1851 = vadd.f32 %v1690, %v1850
  %v1852 = vpop.f32.mrf.mxu0
  %1853 = vmatprep.mubr.bf16.mxu0 0
  %1854 = vmatmul.mubr.bf16.gmra.mxu0 %v1086
  %v1855 = vpop.f32.mrf.mxu0
  %v1856 = vadd.f32 %v1695, %v1855
  %v1857 = vpop.f32.mrf.mxu0
  %v1858 = vpop.f32.mrf.mxu0
  %v1859 = vadd.f32 %v1698, %v1858
  %v1860 = vpop.f32.mrf.mxu0
  %1861 = vmatprep.mubr.bf16.mxu0 0
  %1862 = vmatmul.mubr.bf16.gmra.mxu0 %v1087
  %v1863 = vpop.f32.mrf.mxu0
  %v1864 = vadd.f32 %v1703, %v1863
  %v1865 = vpop.f32.mrf.mxu0
  %v1866 = vpop.f32.mrf.mxu0
  %v1867 = vadd.f32 %v1706, %v1866
  %v1868 = vpop.f32.mrf.mxu0
  %1869 = vmatprep.mubr.bf16.mxu0 0
  %1870 = vmatmul.mubr.bf16.gmra.mxu0 %v1088
  %v1871 = vpop.f32.mrf.mxu0
  %v1872 = vadd.f32 %v1711, %v1871
  %v1873 = vpop.f32.mrf.mxu0
  %v1874 = vpop.f32.mrf.mxu0
  %v1875 = vadd.f32 %v1714, %v1874
  %v1876 = vpop.f32.mrf.mxu0
  %1877 = vmatprep.mubr.bf16.mxu0 0
  %1878 = vmatmul.mubr.bf16.gmra.mxu0 %v1089
  %v1879 = vpop.f32.mrf.mxu0
  %v1880 = vadd.f32 %v1719, %v1879
  %v1881 = vpop.f32.mrf.mxu0
  %v1882 = vpop.f32.mrf.mxu0
  %v1883 = vadd.f32 %v1722, %v1882
  %v1884 = vpop.f32.mrf.mxu0
  %1885 = vmatprep.mubr.bf16.mxu0 0
  %1886 = vmatmul.mubr.bf16.gmra.mxu0 %v1090
  %v1887 = vpop.f32.mrf.mxu0
  %v1888 = vadd.f32 %v1727, %v1887
  %v1889 = vpop.f32.mrf.mxu0
  %v1890 = vpop.f32.mrf.mxu0
  %v1891 = vadd.f32 %v1730, %v1890
  %v1892 = vpop.f32.mrf.mxu0
  %1893 = vdwg.mxu0
  %v1894 = vld [vmem:[%s2] sm:$0xff]
  %v1895 = vld [vmem:[%s2 + $0x8] sm:$0xff]
  %v1896 = vlaneseq
  %v1897 = vshrl.u32 %v1896, 7
  %v1898 = vsub.s32 0, %v1897
  %v1899 = vrot.slane %v1894, %v1898
  %v1900 = vadd.f32 %v1768, %v1899
  %v1901 = vadd.f32 %v1771, %v1899
  %v1902 = vlaneseq
  %v1903 = vshrl.u32 %v1902, 7
  %v1904 = vsub.s32 1, %v1903
  %v1905 = vrot.slane %v1894, %v1904
  %v1906 = vadd.f32 %v1776, %v1905
  %v1907 = vadd.f32 %v1779, %v1905
  %v1908 = vmax.f32 %v1900, %v1906
  %v1909 = vmax.f32 %v1901, %v1907
  %v1910 = vlaneseq
  %v1911 = vshrl.u32 %v1910, 7
  %v1912 = vsub.s32 2, %v1911
  %v1913 = vrot.slane %v1894, %v1912
  %v1914 = vadd.f32 %v1784, %v1913
  %v1915 = vadd.f32 %v1787, %v1913
  %v1916 = vmax.f32 %v1908, %v1914
  %v1917 = vmax.f32 %v1909, %v1915
  %v1918 = vlaneseq
  %v1919 = vshrl.u32 %v1918, 7
  %v1920 = vsub.s32 3, %v1919
  %v1921 = vrot.slane %v1894, %v1920
  %v1922 = vadd.f32 %v1792, %v1921
  %v1923 = vadd.f32 %v1795, %v1921
  %v1924 = vmax.f32 %v1916, %v1922
  %v1925 = vmax.f32 %v1917, %v1923
  %v1926 = vlaneseq
  %v1927 = vshrl.u32 %v1926, 7
  %v1928 = vsub.s32 4, %v1927
  %v1929 = vrot.slane %v1894, %v1928
  %v1930 = vadd.f32 %v1800, %v1929
  %v1931 = vadd.f32 %v1803, %v1929
  %v1932 = vmax.f32 %v1924, %v1930
  %v1933 = vmax.f32 %v1925, %v1931
  %v1934 = vlaneseq
  %v1935 = vshrl.u32 %v1934, 7
  %v1936 = vsub.s32 5, %v1935
  %v1937 = vrot.slane %v1894, %v1936
  %v1938 = vadd.f32 %v1808, %v1937
  %v1939 = vadd.f32 %v1811, %v1937
  %v1940 = vmax.f32 %v1932, %v1938
  %v1941 = vmax.f32 %v1933, %v1939
  %v1942 = vlaneseq
  %v1943 = vshrl.u32 %v1942, 7
  %v1944 = vsub.s32 6, %v1943
  %v1945 = vrot.slane %v1894, %v1944
  %v1946 = vadd.f32 %v1816, %v1945
  %v1947 = vadd.f32 %v1819, %v1945
  %v1948 = vmax.f32 %v1940, %v1946
  %v1949 = vmax.f32 %v1941, %v1947
  %v1950 = vlaneseq
  %v1951 = vshrl.u32 %v1950, 7
  %v1952 = vsub.s32 7, %v1951
  %v1953 = vrot.slane %v1894, %v1952
  %v1954 = vadd.f32 %v1824, %v1953
  %v1955 = vadd.f32 %v1827, %v1953
  %v1956 = vmax.f32 %v1948, %v1954
  %v1957 = vmax.f32 %v1949, %v1955
  %v1958 = vlaneseq
  %v1959 = vshrl.u32 %v1958, 7
  %v1960 = vsub.s32 0, %v1959
  %v1961 = vrot.slane %v1895, %v1960
  %v1962 = vadd.f32 %v1832, %v1961
  %v1963 = vadd.f32 %v1835, %v1961
  %v1964 = vmax.f32 %v1956, %v1962
  %v1965 = vmax.f32 %v1957, %v1963
  %v1966 = vlaneseq
  %v1967 = vshrl.u32 %v1966, 7
  %v1968 = vsub.s32 1, %v1967
  %v1969 = vrot.slane %v1895, %v1968
  %v1970 = vadd.f32 %v1840, %v1969
  %v1971 = vadd.f32 %v1843, %v1969
  %v1972 = vmax.f32 %v1964, %v1970
  %v1973 = vmax.f32 %v1965, %v1971
  %v1974 = vlaneseq
  %v1975 = vshrl.u32 %v1974, 7
  %v1976 = vsub.s32 2, %v1975
  %v1977 = vrot.slane %v1895, %v1976
  %v1978 = vadd.f32 %v1848, %v1977
  %v1979 = vadd.f32 %v1851, %v1977
  %v1980 = vmax.f32 %v1972, %v1978
  %v1981 = vmax.f32 %v1973, %v1979
  %v1982 = vlaneseq
  %v1983 = vshrl.u32 %v1982, 7
  %v1984 = vsub.s32 3, %v1983
  %v1985 = vrot.slane %v1895, %v1984
  %v1986 = vadd.f32 %v1856, %v1985
  %v1987 = vadd.f32 %v1859, %v1985
  %v1988 = vmax.f32 %v1980, %v1986
  %v1989 = vmax.f32 %v1981, %v1987
  %v1990 = vlaneseq
  %v1991 = vshrl.u32 %v1990, 7
  %v1992 = vsub.s32 4, %v1991
  %v1993 = vrot.slane %v1895, %v1992
  %v1994 = vadd.f32 %v1864, %v1993
  %v1995 = vadd.f32 %v1867, %v1993
  %v1996 = vmax.f32 %v1988, %v1994
  %v1997 = vmax.f32 %v1989, %v1995
  %v1998 = vlaneseq
  %v1999 = vshrl.u32 %v1998, 7
  %v2000 = vsub.s32 5, %v1999
  %v2001 = vrot.slane %v1895, %v2000
  %v2002 = vadd.f32 %v1872, %v2001
  %v2003 = vadd.f32 %v1875, %v2001
  %v2004 = vmax.f32 %v1996, %v2002
  %v2005 = vmax.f32 %v1997, %v2003
  %v2006 = vlaneseq
  %v2007 = vshrl.u32 %v2006, 7
  %v2008 = vsub.s32 6, %v2007
  %v2009 = vrot.slane %v1895, %v2008
  %v2010 = vadd.f32 %v1880, %v2009
  %v2011 = vadd.f32 %v1883, %v2009
  %v2012 = vmax.f32 %v2004, %v2010
  %v2013 = vmax.f32 %v2005, %v2011
  %v2014 = vlaneseq
  %v2015 = vshrl.u32 %v2014, 7
  %v2016 = vsub.s32 7, %v2015
  %v2017 = vrot.slane %v1895, %v2016
  %v2018 = vadd.f32 %v1888, %v2017
  %v2019 = vadd.f32 %v1891, %v2017
  %v2020 = vmax.f32 %v2012, %v2018
  %v2021 = vmax.f32 %v2013, %v2019
  %v2022 = vld [vmem:[%s3] sm:$0x1]
  %v2024 = vlaneseq
  %v2025 = vshrl.u32 %v2024, 7
  %v2026 = vsub.s32 0, %v2025
  %v2027 = vrot.slane %v2022, %v2026
  %v2029 = vadd.f32 %v2020, %v2027
  %v2030 = vadd.f32 %v2021, %v2027
  %v2031 = vmax.f32 %v2029, 0.0
  %v2032 = vmax.f32 %v2030, 0.0
  %v2033 = vpack.c.bf16 %v2032, %v2031
  %v2034 = vld [vmem:[%s4] sm:$0xf]
  %v2035 = vld [vmem:[%s4 + $0x4] sm:$0xf]
  %v2036 = vld [vmem:[%s4 + $0x8] sm:$0xf]
  %v2037 = vld [vmem:[%s5] sm:$0x1]
  %v2039 = vlaneseq
  %v2040 = vshrl.u32 %v2039, 7
  %v2041 = vsub.s32 0, %v2040
  %v2042 = vrot.slane %v2037, %v2041
  %v2047 = vunpack.c.l.b16 %v2034
  %v2048 = vunpack.c.l.b16 %v2035
  %v2049 = vunpack.c.l.b16 %v2036
  %v2050 = vpack.c.b16 %v2048, %v2047
  %v2051 = vpack.c.b16 %v2049, %v2049
  %vm2053 = vcmask 195584
  %v2055 = vsel %vm2053, %v2033, 0
  %vm2057 = vcmask 1043456
  %v2059 = vsel %vm2057, %v2051, 0
  %2061 = vmatprep.subr.bf16.mxu0 0
  %2062 = vmatpush1.bf16.msra.mxu0 0
  %2063 = vmatprep.subr.bf16.mxu0 0
  %2064 = vmatpush1.bf16.msra.mxu0 0
  %2065 = vmatprep.subr.bf16.mxu0 0
  %2066 = vmatpush1.bf16.msra.mxu0 0
  %2067 = vmatprep.subr.bf16.mxu0 0
  %2068 = vmatpush1.bf16.msra.mxu0 0
  %2069 = vmatprep.subr.bf16.mxu0 0
  %2070 = vmatpush1.bf16.msra.mxu0 0
  %2071 = vmatprep.subr.bf16.mxu0 0
  %2072 = vmatpush1.bf16.msra.mxu0 0
  %2073 = vmatprep.subr.bf16.mxu0 0
  %2074 = vmatpush1.bf16.msra.mxu0 %v2059
  %2075 = vmatprep.subr.bf16.mxu0 0
  %2076 = vmatpush1.bf16.msra.mxu0 %v2050
  %2077 = vmatprep.subr.bf16.mxu0 0
  %2078 = vmatpush2.bf16.msra.mxu0 0
  %2079 = vmatprep.subr.bf16.mxu0 0
  %2080 = vmatpush2.bf16.msra.mxu0 0
  %2081 = vmatprep.subr.bf16.mxu0 0
  %2082 = vmatpush2.bf16.msra.mxu0 0
  %2083 = vmatprep.subr.bf16.mxu0 0
  %2084 = vmatpush2.bf16.msra.mxu0 0
  %2085 = vmatprep.subr.bf16.mxu0 0
  %2086 = vmatpush2.bf16.msra.mxu0 0
  %2087 = vmatprep.subr.bf16.mxu0 0
  %2088 = vmatpush2.bf16.msra.mxu0 0
  %2089 = vmatprep.subr.bf16.mxu0 0
  %2090 = vmatpush2.bf16.msra.mxu0 0
  %2091 = vmatprep.subr.bf16.mxu0 0
  %2092 = vmatpush2.bf16.msra.mxu0 0
  %2093 = vmatprep.mubr.bf16.mxu0 0
  %2094 = vmatmul.mubr.bf16.gmra.mxu0 %v2055
  %v2095 = vpop.f32.mrf.mxu0
  %v2096 = vadd.f32 %v2042, %v2095
  %v2097 = vpop.f32.mrf.mxu0
  %v2098 = vpop.f32.mrf.mxu0
  %v2099 = vadd.f32 %v2042, %v2098
  %v2100 = vpop.f32.mrf.mxu0
  %2101 = vdwg.mxu0
  %v2102 = vmax.f32 %v2096, 0.0
  %v2103 = vmax.f32 %v2099, 0.0
  %v2104 = vld [vmem:[%s6] sm:$0xff]
  %v2105 = vld [vmem:[%s6 + $0x8] sm:$0xff]
  %2107 = vset.pattern.permute.xlu0 0
  %2108 = vperm.xlu0 %2107, %v2104
  %v2109 = vpop.permute.xlu0 %2108
  %2112 = vset.pattern.permute.xlu0 0
  %2113 = vperm.xlu0 %2112, %v2105
  %v2114 = vpop.permute.xlu0 %2113
  %v2116 = vmul.f32 %v2102, %v2109
  %v2117 = vmul.f32 %v2103, %v2114
  %v2118 = vld [vmem:[%s7] sm:$0xff]
  %v2119 = vld [vmem:[%s7 + $0x8] sm:$0xff]
  %v2120 = vld [vmem:[%s8] sm:$0xff]
  %v2121 = vld [vmem:[%s8 + $0x8] sm:$0xff]
  %2124 = vrot.lane.b32.xlu0 %v2118, 16
  %v2125 = vpop.permute.xlu0 %2124
  %2126 = vrot.lane.b32.xlu0 %v2119, 16
  %v2127 = vpop.permute.xlu0 %2126
  %2132 = vrot.lane.b32.xlu0 %v2120, 24
  %v2133 = vpop.permute.xlu0 %2132
  %2134 = vrot.lane.b32.xlu0 %v2121, 24
  %v2135 = vpop.permute.xlu0 %2134
  %vm2138 = vcmask 130048
  %v2139 = vsel %vm2138, %v2116, %v2125
  %v2140 = vsel %vm2138, %v2117, %v2127
  %v2141 = vsel %vm2053, %v2139, %v2133
  %v2142 = vsel %vm2053, %v2140, %v2135
  %v2143 = vpack.c.bf16 %v2142, %v2141
  %v2144 = vld [vmem:[%s9] sm:$0xf]
  %v2145 = vld [vmem:[%s9 + $0x4] sm:$0xf]
  %v2146 = vld [vmem:[%s9 + $0x8] sm:$0xf]
  %v2147 = vld [vmem:[%s9 + $0xc] sm:$0xf]
  %v2148 = vld [vmem:[%s10] sm:$0x1]
  %v2150 = vlaneseq
  %v2151 = vshrl.u32 %v2150, 7
  %v2152 = vsub.s32 0, %v2151
  %v2153 = vrot.slane %v2148, %v2152
  %v2159 = vunpack.c.l.b16 %v2144
  %v2160 = vunpack.c.l.b16 %v2145
  %v2161 = vunpack.c.l.b16 %v2146
  %v2162 = vunpack.c.l.b16 %v2147
  %v2163 = vpack.c.b16 %v2160, %v2159
  %v2164 = vpack.c.b16 %v2162, %v2161
  %vm2167 = vcmask 261120
  %v2169 = vsel %vm2167, %v2143, 0
  %2171 = vmatprep.subr.bf16.mxu0 0
  %2172 = vmatpush1.bf16.msra.mxu0 0
  %2173 = vmatprep.subr.bf16.mxu0 0
  %2174 = vmatpush1.bf16.msra.mxu0 0
  %2175 = vmatprep.subr.bf16.mxu0 0
  %2176 = vmatpush1.bf16.msra.mxu0 0
  %2177 = vmatprep.subr.bf16.mxu0 0
  %2178 = vmatpush1.bf16.msra.mxu0 0
  %2179 = vmatprep.subr.bf16.mxu0 0
  %2180 = vmatpush1.bf16.msra.mxu0 0
  %2181 = vmatprep.subr.bf16.mxu0 0
  %2182 = vmatpush1.bf16.msra.mxu0 0
  %2183 = vmatprep.subr.bf16.mxu0 0
  %2184 = vmatpush1.bf16.msra.mxu0 %v2164
  %2185 = vmatprep.subr.bf16.mxu0 0
  %2186 = vmatpush1.bf16.msra.mxu0 %v2163
  %2187 = vmatprep.subr.bf16.mxu0 0
  %2188 = vmatpush2.bf16.msra.mxu0 0
  %2189 = vmatprep.subr.bf16.mxu0 0
  %2190 = vmatpush2.bf16.msra.mxu0 0
  %2191 = vmatprep.subr.bf16.mxu0 0
  %2192 = vmatpush2.bf16.msra.mxu0 0
  %2193 = vmatprep.subr.bf16.mxu0 0
  %2194 = vmatpush2.bf16.msra.mxu0 0
  %2195 = vmatprep.subr.bf16.mxu0 0
  %2196 = vmatpush2.bf16.msra.mxu0 0
  %2197 = vmatprep.subr.bf16.mxu0 0
  %2198 = vmatpush2.bf16.msra.mxu0 0
  %2199 = vmatprep.subr.bf16.mxu0 0
  %2200 = vmatpush2.bf16.msra.mxu0 0
  %2201 = vmatprep.subr.bf16.mxu0 0
  %2202 = vmatpush2.bf16.msra.mxu0 0
  %2203 = vmatprep.mubr.bf16.mxu0 0
  %2204 = vmatmul.mubr.bf16.gmra.mxu0 %v2169
  %v2205 = vpop.f32.mrf.mxu0
  %v2206 = vadd.f32 %v2153, %v2205
  %v2207 = vpop.f32.mrf.mxu0
  %v2208 = vpop.f32.mrf.mxu0
  %v2209 = vadd.f32 %v2153, %v2208
  %v2210 = vpop.f32.mrf.mxu0
  %2211 = vdwg.mxu0
  %v2212 = vmax.f32 %v2206, 0.0
  %v2213 = vmax.f32 %v2209, 0.0
  %v2214 = vpack.c.bf16 %v2213, %v2212
  %v2215 = vld [vmem:[%s11] sm:$0xf]
  %v2216 = vld [vmem:[%s11 + $0x4] sm:$0xf]
  %v2217 = vld [vmem:[%s11 + $0x8] sm:$0xf]
  %v2218 = vld [vmem:[%s11 + $0xc] sm:$0xf]
  %v2219 = vld [vmem:[%s12] sm:$0x1]
  %v2221 = vlaneseq
  %v2222 = vshrl.u32 %v2221, 7
  %v2223 = vsub.s32 0, %v2222
  %v2224 = vrot.slane %v2219, %v2223
  %v2230 = vunpack.c.l.b16 %v2215
  %v2231 = vunpack.c.l.b16 %v2216
  %v2232 = vunpack.c.l.b16 %v2217
  %v2233 = vunpack.c.l.b16 %v2218
  %v2234 = vpack.c.b16 %v2231, %v2230
  %v2235 = vpack.c.b16 %v2233, %v2232
  %v2239 = vsel %vm2167, %v2214, 0
  %2241 = vmatprep.subr.bf16.mxu0 0
  %2242 = vmatpush1.bf16.msra.mxu0 0
  %2243 = vmatprep.subr.bf16.mxu0 0
  %2244 = vmatpush1.bf16.msra.mxu0 0
  %2245 = vmatprep.subr.bf16.mxu0 0
  %2246 = vmatpush1.bf16.msra.mxu0 0
  %2247 = vmatprep.subr.bf16.mxu0 0
  %2248 = vmatpush1.bf16.msra.mxu0 0
  %2249 = vmatprep.subr.bf16.mxu0 0
  %2250 = vmatpush1.bf16.msra.mxu0 0
  %2251 = vmatprep.subr.bf16.mxu0 0
  %2252 = vmatpush1.bf16.msra.mxu0 0
  %2253 = vmatprep.subr.bf16.mxu0 0
  %2254 = vmatpush1.bf16.msra.mxu0 %v2235
  %2255 = vmatprep.subr.bf16.mxu0 0
  %2256 = vmatpush1.bf16.msra.mxu0 %v2234
  %2257 = vmatprep.subr.bf16.mxu0 0
  %2258 = vmatpush2.bf16.msra.mxu0 0
  %2259 = vmatprep.subr.bf16.mxu0 0
  %2260 = vmatpush2.bf16.msra.mxu0 0
  %2261 = vmatprep.subr.bf16.mxu0 0
  %2262 = vmatpush2.bf16.msra.mxu0 0
  %2263 = vmatprep.subr.bf16.mxu0 0
  %2264 = vmatpush2.bf16.msra.mxu0 0
  %2265 = vmatprep.subr.bf16.mxu0 0
  %2266 = vmatpush2.bf16.msra.mxu0 0
  %2267 = vmatprep.subr.bf16.mxu0 0
  %2268 = vmatpush2.bf16.msra.mxu0 0
  %2269 = vmatprep.subr.bf16.mxu0 0
  %2270 = vmatpush2.bf16.msra.mxu0 0
  %2271 = vmatprep.subr.bf16.mxu0 0
  %2272 = vmatpush2.bf16.msra.mxu0 0
  %2273 = vmatprep.mubr.bf16.mxu0 0
  %2274 = vmatmul.mubr.bf16.gmra.mxu0 %v2239
  %v2275 = vpop.f32.mrf.mxu0
  %v2276 = vadd.f32 %v2224, %v2275
  %v2277 = vpop.f32.mrf.mxu0
  %v2278 = vpop.f32.mrf.mxu0
  %v2279 = vadd.f32 %v2224, %v2278
  %v2280 = vpop.f32.mrf.mxu0
  %2281 = vdwg.mxu0
  %2282 = vmax.xlane.f32.xlu0 %v2276
  %v2283 = vpop.xlane.xlu0 %2282
  %2284 = vmax.xlane.f32.xlu0 %v2279
  %v2285 = vpop.xlane.xlu0 %2284
  %v2286 = vsub.f32 %v2276, %v2283
  %v2287 = vsub.f32 %v2279, %v2285
  %v2288 = vmul.f32 %v2286, 1.442695
  %v2289 = vpow.pop %v2288
  %v2290 = vmul.f32 %v2287, 1.442695
  %v2291 = vpow.pop %v2290
  %2292 = vadd.xlane.f32.xlu0 %v2289
  %v2293 = vpop.xlane.xlu0 %2292
  %2294 = vadd.xlane.f32.xlu0 %v2291
  %v2295 = vpop.xlane.xlu0 %2294
  %v2296 = vlog2.pop %v2293
  %v2297 = vmul.f32 %v2296, 0.6931472
  %v2298 = vlog2.pop %v2295
  %v2299 = vmul.f32 %v2298, 0.6931472
  %v2300 = vsub.f32 %v2286, %v2297
  %v2301 = vsub.f32 %v2287, %v2299
  %2302 = vst [vmem:[%s13] sm:$0xff] %v2300
  %2303 = vst [vmem:[%s13 + $0x8] sm:$0xff] %v2301
  // Predicated region
  $region54: #{cnn_model_forward.1} parent=0 // pred_check
    _
  $region55: #{cnn_model_forward.1} parent=0 // pred_check_branch
    %2305 = sbr.rel (0) target = $region57
  $region56: #{cnn_model_forward.1} parent=0 // pred_region
    _
  $region57: #{cnn_model_forward.1} parent=0 // pred_fallthru
    _
  // Predicated region
  $region58: #{cnn_model_forward.1} parent=0 // pred_check
    _
  $region59: #{cnn_model_forward.1} parent=0 // pred_check_branch
    %2307 = sbr.rel (0) target = $region61
  $region60: #{cnn_model_forward.1} parent=0 // pred_region
    _
  $region61: #{cnn_model_forward.1} parent=0 // pred_fallthru
    _

</llo_original>
